<compile_context>
chip_gen: v5e
topology: v5e:2x2
jax: 0.10.0
libtpu: 0.0.40
codegen_flags: <defaults>
</compile_context>

<pallas_src>
import functools

import jax
import jax.numpy as jnp
from jax import lax
from jax.experimental import pallas as pl
from jax.experimental.pallas import tpu as pltpu

JACCARD_THRESH = 0.5
NEGPOS_RATIO = 3
VARIANCES = (0.1, 0.2)


# ----------------------------------------------------------------------------
# Glue (plain JAX): SSD `match` -- jaccard overlap, best-prior assignment, encode
# ----------------------------------------------------------------------------
def _point_form(boxes_cxcywh):
    return jnp.concatenate(
        [boxes_cxcywh[:, :2] - boxes_cxcywh[:, 2:] / 2.0,
         boxes_cxcywh[:, :2] + boxes_cxcywh[:, 2:] / 2.0], axis=1)


def _jaccard(box_a, box_b):  # box_a [A,4] xyxy, box_b [B,4] xyxy
    max_xy = jnp.minimum(box_a[:, None, 2:], box_b[None, :, 2:])
    min_xy = jnp.maximum(box_a[:, None, :2], box_b[None, :, :2])
    inter_wh = jnp.clip(max_xy - min_xy, 0.0)
    inter = inter_wh[..., 0] * inter_wh[..., 1]
    area_a = ((box_a[:, 2] - box_a[:, 0]) * (box_a[:, 3] - box_a[:, 1]))[:, None]
    area_b = ((box_b[:, 2] - box_b[:, 0]) * (box_b[:, 3] - box_b[:, 1]))[None, :]
    return inter / (area_a + area_b - inter)


def _encode(matched_xyxy, priors_cxcywh, variances):
    g_cxcy = (matched_xyxy[:, :2] + matched_xyxy[:, 2:]) / 2.0 - priors_cxcywh[:, :2]
    g_cxcy = g_cxcy / (variances[0] * priors_cxcywh[:, 2:])
    g_wh = (matched_xyxy[:, 2:] - matched_xyxy[:, :2]) / priors_cxcywh[:, 2:]
    g_wh = jnp.log(g_wh) / variances[1]
    return jnp.concatenate([g_cxcy, g_wh], axis=1)


def _match_single(truths, labels, dbox_cxcywh, thresh, variances):
    num_obj = truths.shape[0]
    overlaps = _jaccard(truths, _point_form(dbox_cxcywh))        # [num_obj, D]
    best_prior_idx = jnp.argmax(overlaps, axis=1)                # [num_obj]
    best_truth_overlap = jnp.max(overlaps, axis=0)               # [D]
    best_truth_idx = jnp.argmax(overlaps, axis=0)                # [D]
    best_truth_overlap = best_truth_overlap.at[best_prior_idx].set(2.0)
    best_truth_idx = best_truth_idx.at[best_prior_idx].set(jnp.arange(num_obj))
    matches = truths[best_truth_idx]                             # [D, 4]
    conf = labels[best_truth_idx].astype(jnp.int32) + 1          # [D]
    conf = jnp.where(best_truth_overlap < thresh, 0, conf)
    loc = _encode(matches, dbox_cxcywh, variances)               # [D, 4]
    return loc, conf


# ----------------------------------------------------------------------------
# Pallas kernel: the loss hot path
# ----------------------------------------------------------------------------
def _multibox_loss_kernel(conf_ref, loc_ref, label_ref, out_ref,
                          ce_row, acc, *, num_dbox, dp8, td8, negpos_ratio,
                          bisect_iters=30):
    d = pl.program_id(1)
    nd = pl.num_programs(1)

    # Per-batch-row scalar accumulators (SMEM scratch), reset at the start of the row.
    @pl.when(d == 0)
    def _():
        acc[0] = 0.0   # smooth-L1 sum over positives
        acc[1] = 0.0   # CE sum over positives
        acc[2] = 0.0   # number of positives

    conf = conf_ref[...].astype(jnp.float32)            # (C, 8, td8)  f32 compute
    num_classes = conf.shape[0]
    label = label_ref[...]                               # (8, td8) int32
    pos = label > 0
    posf = pos.astype(jnp.float32)                       # (8, td8)

    # ---- smooth-L1 localization loss over positive boxes (sum reduction) ----
    loc = loc_ref[...].astype(jnp.float32)               # (8, 8, td8): pred[:4], tgt[4:]
    diff = loc[:4] - loc[4:]                              # (4, 8, td8)
    ad = jnp.abs(diff)
    sl1 = jnp.where(ad < 1.0, 0.5 * diff * diff, ad - 0.5)
    acc[0] += jnp.sum(sl1 * posf)

    # ---- per-box cross-entropy (class axis outermost; boxes fill sublanes+lanes) ----
    m = jnp.max(conf, axis=0)                                       # (8, td8)
    lse = m + jnp.log(jnp.sum(jnp.exp(conf - m), axis=0))           # (8, td8)
    picked = jnp.zeros_like(lse)
    for c in range(num_classes):                                    # unrolled, no iota
        picked = picked + jnp.where(label == c, conf[c], 0.0)
    ce = lse - picked                                               # (8, td8)

    acc[1] += jnp.sum(ce * posf)
    acc[2] += jnp.sum(posf)

    # ---- hard-negative candidates: zero positives and right-padding, store dense ----
    sub = lax.broadcasted_iota(jnp.int32, (8, td8), 0)
    lane = lax.broadcasted_iota(jnp.int32, (8, td8), 1) + d * td8
    valid = (sub * dp8 + lane) < num_dbox
    ce_rank = jnp.where(jnp.logical_and(valid, jnp.logical_not(pos)), ce, 0.0)
    off = pl.multiple_of(d * td8, 128)
    ce_row[:, pl.ds(off, td8)] = ce_rank

    # ---- end of batch row: top-k negative selection + per-row partial outputs ----
    @pl.when(d == nd - 1)
    def _():
        row = ce_row[...]                                           # (8, dp8) dense

        def _r11(x, op):    # staged full reduce to a (1, 1) value
            return op(op(x, axis=1, keepdims=True), axis=0, keepdims=True)

        k = jnp.minimum(acc[2] * jnp.float32(negpos_ratio),
                        jnp.float32(num_dbox))                      # scalar f32

        # Binary search on value for the k-th largest element of `row`.
        hi0 = _r11(row, jnp.max) + 1e-6                              # (1, 1)
        lo0 = jnp.full((1, 1), -1e-6, jnp.float32)

        def body(_, carry):
            lo, hi = carry
            mid = 0.5 * (lo + hi)
            cnt = _r11((row > mid).astype(jnp.float32), jnp.sum)
            geq = cnt >= k
            return jnp.where(geq, mid, lo), jnp.where(geq, hi, mid)

        lo, hi = lax.fori_loop(0, bisect_iters, body, (lo0, hi0), unroll=True)
        cnt_hi = _r11((row > hi).astype(jnp.float32), jnp.sum)
        sum_hi = _r11(jnp.where(row > hi, row, 0.0), jnp.sum)
        # Top-k sum of mining losses (= CE sum over hard negatives); exact under ties
        # up to ~k * range * 2^-bisect_iters.
        neg_sum = sum_hi + (k - cnt_hi) * jnp.maximum(hi, 0.0)       # (1, 1)

        lane128 = lax.broadcasted_iota(jnp.int32, (1, 128), 1)
        vals = (jnp.where(lane128 == 0, acc[0], 0.0)
                + jnp.where(lane128 == 1, acc[1] + neg_sum, 0.0)
                + jnp.where(lane128 == 2, acc[2], 0.0))
        out_ref[...] = vals


def _round_up(x, m):
    return (x + m - 1) // m * m


def _choose_tiles(num_dbox, num_classes, budget_bytes=8 * 1024 * 1024):
    """D is padded to a multiple of 1024 and folded into (8, dp8).  The D-tile is the
    whole row (nd == 1) unless the double-buffered input blocks would blow the VMEM
    budget, in which case the row splits into the fewest equal 128-lane-aligned tiles
    that fit (only matters for very large class counts, e.g. on v7x's smaller VMEM)."""
    d_pad = _round_up(max(num_dbox, 1), 1024)
    dp8 = d_pad // 8
    n_cols = dp8 // 128                                  # 128-lane columns, folded
    bytes_per_col = 2 * (num_classes + 8 + 1) * 8 * 128 * 4   # double-buffered inputs
    nd = n_cols
    for cand in range(1, n_cols + 1):
        if n_cols % cand:
            continue
        if (n_cols // cand) * bytes_per_col <= budget_bytes:
            nd = cand
            break
    return d_pad, dp8, dp8 // nd, nd


def _multibox_loss_pallas(conf_data, loc_data, loc_t, conf_t_label,
                          conf_is_channel_major=False):
    if conf_is_channel_major:
        B, C, D = conf_data.shape
        conf = conf_data
    else:
        B, D, C = conf_data.shape
        # TODO(synk): have the upstream conf head emit channel-major [B, C, D] (and/or
        # bf16) so this transpose's extra HBM round trip of the largest tensor goes
        # away; the kernel already accepts that layout via conf_is_channel_major=True
        # and upcasts low-precision inputs internally.
        conf = jnp.transpose(conf_data, (0, 2, 1))                    # [B, C, D]

    d_pad, dp8, td8, nd = _choose_tiles(D, C)
    pad = d_pad - D

    # Fuse predicted + target box offsets into one (8, D)-coordinate input so the loc
    # DMA is a single full-sublane stream per step.
    loc8 = jnp.concatenate([jnp.transpose(loc_data, (0, 2, 1)),
                            jnp.transpose(loc_t, (0, 2, 1))],
                           axis=1).astype(jnp.float32)                # [B, 8, D]
    label = conf_t_label.astype(jnp.int32)                            # [B, D]
    if pad:
        conf = jnp.pad(conf, ((0, 0), (0, 0), (0, pad)))
        loc8 = jnp.pad(loc8, ((0, 0), (0, 0), (0, pad)))
        label = jnp.pad(label, ((0, 0), (0, pad)))

    # Fold D into (8, dp8): every per-box quantity becomes sublane+lane dense.
    conf = conf.reshape(B, C, 8, dp8)
    loc8 = loc8.reshape(B, 8, 8, dp8)
    label = label.reshape(B, 8, dp8)

    kernel = functools.partial(_multibox_loss_kernel, num_dbox=D, dp8=dp8, td8=td8,
                               negpos_ratio=NEGPOS_RATIO)

    out = pl.pallas_call(
        kernel,
        out_shape=jax.ShapeDtypeStruct((B, 1, 128), jnp.float32),
        grid_spec=pltpu.PrefetchScalarGridSpec(
            num_scalar_prefetch=0,
            grid=(B, nd),
            in_specs=[
                pl.BlockSpec((None, C, 8, td8), lambda b, d: (b, 0, 0, d)),  # conf
                pl.BlockSpec((None, 8, 8, td8), lambda b, d: (b, 0, 0, d)),  # loc p||t
                pl.BlockSpec((None, 8, td8), lambda b, d: (b, 0, d)),        # labels
            ],
            out_specs=pl.BlockSpec((None, 1, 128), lambda b, d: (b, 0, 0)),
            scratch_shapes=[
                pltpu.VMEM((8, dp8), jnp.float32),   # dense per-row mining-loss buffer
                pltpu.SMEM((3,), jnp.float32),       # per-row scalar accumulators
            ],
        ),
        compiler_params=pltpu.CompilerParams(
            dimension_semantics=("parallel", "arbitrary")),
    )(conf, loc8, label)

    loss_l = jnp.sum(out[:, 0, 0])
    loss_c = jnp.sum(out[:, 0, 1])
    n = jnp.maximum(jnp.sum(out[:, 0, 2]), 1.0)   # guard: no positives -> no NaN
    return loss_l / n, loss_c / n


# ----------------------------------------------------------------------------
# Module-equivalent forward
# ----------------------------------------------------------------------------
@jax.jit
def multibox_loss_forward(conf_data, loc_data, targets, dboxes):
    """predictions = (conf_data [B,D,C], loc_data [B,D,4]);
    targets [B, num_obj, 5] (xmin,ymin,xmax,ymax,label); dboxes [D,4] (cx,cy,w,h)."""
    truths = targets[..., :4]
    labels = targets[..., 4]
    match_fn = functools.partial(_match_single, thresh=JACCARD_THRESH,
                                 dbox_cxcywh=dboxes, variances=VARIANCES)
    loc_t, conf_t_label = jax.vmap(lambda t, l: match_fn(t, l))(truths, labels)
    return _multibox_loss_pallas(conf_data, loc_data,
                                 loc_t.astype(jnp.float32),
                                 conf_t_label.astype(jnp.int32))


# ----------------------------------------------------------------------------
# Pure-JAX reference (double-argsort hard negative mining) for self-check
# ----------------------------------------------------------------------------
def _reference_losses(conf_data, loc_data, loc_t, conf_t_label):
    D = conf_data.shape[1]
    pos = conf_t_label > 0
    diff = loc_data.astype(jnp.float32) - loc_t
    ad = jnp.abs(diff)
    sl1 = jnp.where(ad < 1.0, 0.5 * diff * diff, ad - 0.5)
    loss_l = jnp.sum(jnp.where(pos[..., None], sl1, 0.0))
    logits = conf_data.astype(jnp.float32)
    lse = jax.scipy.special.logsumexp(logits, axis=-1)
    picked = jnp.take_along_axis(logits, conf_t_label[..., None], axis=-1)[..., 0]
    ce = lse - picked
    ce_rank = jnp.where(pos, 0.0, ce)
    num_pos = jnp.sum(pos, axis=1, keepdims=True)
    num_neg = jnp.minimum(num_pos * NEGPOS_RATIO, D)
    loss_idx = jnp.argsort(-ce_rank, axis=1)
    idx_rank = jnp.argsort(loss_idx, axis=1)
    neg = idx_rank < num_neg
    sel = jnp.logical_or(pos, neg)
    loss_c = jnp.sum(jnp.where(sel, ce, 0.0))
    n = jnp.maximum(jnp.sum(num_pos), 1).astype(jnp.float32)
    return loss_l / n, loss_c / n


if __name__ == "__main__":
    B, D, C, NUM_OBJ = 2, 128, 8, 3
    key = jax.random.PRNGKey(0)
    k1, k2, k3, k4, k5, k6 = jax.random.split(key, 6)

    # Predictions.
    conf_data = jax.random.normal(k1, (B, D, C), dtype=jnp.float32)
    loc_data = 0.1 * jax.random.normal(k2, (B, D, 4), dtype=jnp.float32)

    # Default boxes (cx, cy, w, h) in [0, 1].
    dbox_cxcy = jax.random.uniform(k3, (D, 2), minval=0.05, maxval=0.95)
    dbox_wh = jax.random.uniform(k4, (D, 2), minval=0.1, maxval=0.4)
    dboxes = jnp.concatenate([dbox_cxcy, dbox_wh], axis=1).astype(jnp.float32)

    # Ground-truth targets [B, NUM_OBJ, 5] = (xmin, ymin, xmax, ymax, label_ind).
    gt_min = jax.random.uniform(k5, (B, NUM_OBJ, 2), minval=0.0, maxval=0.55)
    gt_wh = jax.random.uniform(k6, (B, NUM_OBJ, 2), minval=0.2, maxval=0.4)
    gt_max = gt_min + gt_wh
    gt_labels = (jnp.arange(B * NUM_OBJ, dtype=jnp.float32).reshape(B, NUM_OBJ, 1)
                 % (C - 1))
    targets = jnp.concatenate([gt_min, gt_max, gt_labels], axis=-1).astype(jnp.float32)

    loss_l, loss_c = multibox_loss_forward(conf_data, loc_data, targets, dboxes)
    loss_l, loss_c = jax.block_until_ready((loss_l, loss_c))
    assert jnp.isfinite(loss_l) and jnp.isfinite(loss_c)

    # Self-check against a pure-JAX (double-argsort) reference on the same matches.
    truths, labels = targets[..., :4], targets[..., 4]
    match_fn = functools.partial(_match_single, thresh=JACCARD_THRESH,
                                 dbox_cxcywh=dboxes, variances=VARIANCES)
    loc_t_ref, conf_t_ref = jax.vmap(lambda t, l: match_fn(t, l))(truths, labels)
    ref_l, ref_c = _reference_losses(conf_data, loc_data,
                                     loc_t_ref.astype(jnp.float32),
                                     conf_t_ref.astype(jnp.int32))
    assert abs(float(loss_l) - float(ref_l)) <= 1e-3 + 1e-3 * abs(float(ref_l))
    assert abs(float(loss_c) - float(ref_c)) <= 1e-3 + 1e-3 * abs(float(ref_c))

    print("KERNEL_OK")
</pallas_src>

<mosaic_0001>
module attributes {stable_mosaic.version = 11 : i64} {
  func.func @_multibox_loss_kernel(%arg0: i32, %arg1: i32, %arg2: memref<1x8x8x128xf32, #tpu.memory_space<vmem>>, %arg3: memref<1x8x8x128xf32, #tpu.memory_space<vmem>>, %arg4: memref<1x8x128xi32, #tpu.memory_space<vmem>>, %arg5: memref<1x1x128xf32, #tpu.memory_space<vmem>>, %arg6: memref<8x128xf32, #tpu.memory_space<vmem>>, %arg7: memref<3xf32, #tpu.memory_space<smem>>) attributes {dimension_semantics = [#tpu.dimension_semantics<parallel>, #tpu.dimension_semantics<arbitrary>], iteration_bounds = array<i64: 2, 1>, scalar_prefetch = 0 : i64, scratch_operands = 2 : i64, tpu.core_type = #tpu.core_type<tc>, window_params = [{transform_indices = @transform_0, window_bounds = array<i64: 1, 8, 8, 128>}, {transform_indices = @transform_1, window_bounds = array<i64: 1, 8, 8, 128>}, {transform_indices = @transform_2, window_bounds = array<i64: 1, 8, 128>}, {transform_indices = @transform_3, window_bounds = array<i64: 1, 1, 128>}]} {
    %c0_i32 = arith.constant 0 : i32
    %0 = arith.cmpi eq, %arg1, %c0_i32 : i32
    %1 = arith.extui %0 : i1 to i32
    %c0_i32_0 = arith.constant 0 : i32
    %2 = arith.cmpi ne, %1, %c0_i32_0 : i32
    scf.if %2 {
      %cst_41 = arith.constant 0.000000e+00 : f32
      %c0_42 = arith.constant 0 : index
      %137 = memref.load %arg7[%c0_42] : memref<3xf32, #tpu.memory_space<smem>>
      memref.store %cst_41, %arg7[%c0_42] : memref<3xf32, #tpu.memory_space<smem>>
      %cst_43 = arith.constant 0.000000e+00 : f32
      %c1_44 = arith.constant 1 : index
      %138 = memref.load %arg7[%c1_44] : memref<3xf32, #tpu.memory_space<smem>>
      memref.store %cst_43, %arg7[%c1_44] : memref<3xf32, #tpu.memory_space<smem>>
      %cst_45 = arith.constant 0.000000e+00 : f32
      %c2_46 = arith.constant 2 : index
      %139 = memref.load %arg7[%c2_46] : memref<3xf32, #tpu.memory_space<smem>>
      memref.store %cst_45, %arg7[%c2_46] : memref<3xf32, #tpu.memory_space<smem>>
    } else {
    }
    %c0 = arith.constant 0 : index
    %c0_1 = arith.constant 0 : index
    %c0_2 = arith.constant 0 : index
    %c0_3 = arith.constant 0 : index
    %3 = vector.load %arg2[%c0, %c0_1, %c0_2, %c0_3] : memref<1x8x8x128xf32, #tpu.memory_space<vmem>>, vector<1x8x8x128xf32>
    %4 = vector.shape_cast %3 : vector<1x8x8x128xf32> to vector<8x8x128xf32>
    %c0_4 = arith.constant 0 : index
    %c0_5 = arith.constant 0 : index
    %c0_6 = arith.constant 0 : index
    %5 = vector.load %arg4[%c0_4, %c0_5, %c0_6] : memref<1x8x128xi32, #tpu.memory_space<vmem>>, vector<1x8x128xi32>
    %6 = vector.shape_cast %5 : vector<1x8x128xi32> to vector<8x128xi32>
    %c0_i32_7 = arith.constant 0 : i32
    %7 = vector.broadcast %c0_i32_7 : i32 to vector<8x128xi32>
    %8 = arith.cmpi sgt, %6, %7 : vector<8x128xi32>
    %9 = arith.extui %8 : vector<8x128xi1> to vector<8x128xi32>
    %10 = arith.sitofp %9 : vector<8x128xi32> to vector<8x128xf32>
    %c0_8 = arith.constant 0 : index
    %c0_9 = arith.constant 0 : index
    %c0_10 = arith.constant 0 : index
    %c0_11 = arith.constant 0 : index
    %11 = vector.load %arg3[%c0_8, %c0_9, %c0_10, %c0_11] : memref<1x8x8x128xf32, #tpu.memory_space<vmem>>, vector<1x8x8x128xf32>
    %12 = vector.shape_cast %11 : vector<1x8x8x128xf32> to vector<8x8x128xf32>
    %13 = vector.extract_strided_slice %12 {offsets = [0, 0, 0], sizes = [4, 8, 128], strides = [1, 1, 1]} : vector<8x8x128xf32> to vector<4x8x128xf32>
    %14 = vector.extract_strided_slice %12 {offsets = [4, 0, 0], sizes = [4, 8, 128], strides = [1, 1, 1]} : vector<8x8x128xf32> to vector<4x8x128xf32>
    %15 = arith.subf %13, %14 : vector<4x8x128xf32>
    %16 = math.absf %15 : vector<4x8x128xf32>
    %cst = arith.constant 1.000000e+00 : f32
    %17 = vector.broadcast %cst : f32 to vector<4x8x128xf32>
    %18 = arith.cmpf olt, %16, %17 : vector<4x8x128xf32>
    %cst_12 = arith.constant 5.000000e-01 : f32
    %19 = vector.broadcast %cst_12 : f32 to vector<4x8x128xf32>
    %20 = arith.mulf %19, %15 : vector<4x8x128xf32>
    %21 = arith.mulf %20, %15 : vector<4x8x128xf32>
    %cst_13 = arith.constant 5.000000e-01 : f32
    %22 = vector.broadcast %cst_13 : f32 to vector<4x8x128xf32>
    %23 = arith.subf %16, %22 : vector<4x8x128xf32>
    %24 = arith.select %18, %21, %23 : vector<4x8x128xi1>, vector<4x8x128xf32>
    %c0_14 = arith.constant 0 : index
    %25 = memref.load %arg7[%c0_14] : memref<3xf32, #tpu.memory_space<smem>>
    %26 = vector.shape_cast %10 : vector<8x128xf32> to vector<1x8x128xf32>
    %27 = vector.broadcast %26 : vector<1x8x128xf32> to vector<4x8x128xf32>
    %28 = arith.mulf %24, %27 : vector<4x8x128xf32>
    %29 = vector.shape_cast %28 : vector<4x8x128xf32> to vector<1x4x8x128xf32>
    %cst_15 = arith.constant dense<0.000000e+00> : vector<1xf32>
    %30 = vector.multi_reduction <add>, %29, %cst_15 [1, 2, 3] : vector<1x4x8x128xf32> to vector<1xf32>
    %31 = vector.shape_cast %30 : vector<1xf32> to vector<1x1x1x1xf32>
    %32 = vector.extract %31[0, 0, 0, 0] : f32 from vector<1x1x1x1xf32>
    %33 = arith.addf %25, %32 : f32
    %c0_16 = arith.constant 0 : index
    %34 = memref.load %arg7[%c0_16] : memref<3xf32, #tpu.memory_space<smem>>
    memref.store %33, %arg7[%c0_16] : memref<3xf32, #tpu.memory_space<smem>>
    %cst_17 = arith.constant dense<0xFF800000> : vector<8x128xf32>
    %35 = vector.multi_reduction <maximumf>, %4, %cst_17 [0] : vector<8x8x128xf32> to vector<8x128xf32>
    %36 = vector.shape_cast %35 : vector<8x128xf32> to vector<1x8x128xf32>
    %37 = vector.broadcast %36 : vector<1x8x128xf32> to vector<8x8x128xf32>
    %38 = arith.subf %4, %37 : vector<8x8x128xf32>
    %39 = math.exp %38 : vector<8x8x128xf32>
    %cst_18 = arith.constant dense<0.000000e+00> : vector<8x128xf32>
    %40 = vector.multi_reduction <add>, %39, %cst_18 [0] : vector<8x8x128xf32> to vector<8x128xf32>
    %41 = math.log %40 : vector<8x128xf32>
    %42 = arith.addf %35, %41 : vector<8x128xf32>
    %cst_19 = arith.constant 0.000000e+00 : f32
    %43 = vector.broadcast %cst_19 : f32 to vector<8x128xf32>
    %c0_i32_20 = arith.constant 0 : i32
    %44 = vector.broadcast %c0_i32_20 : i32 to vector<8x128xi32>
    %45 = arith.cmpi eq, %6, %44 : vector<8x128xi32>
    %46 = vector.extract_strided_slice %4 {offsets = [0, 0, 0], sizes = [1, 8, 128], strides = [1, 1, 1]} : vector<8x8x128xf32> to vector<1x8x128xf32>
    %47 = vector.shape_cast %46 : vector<1x8x128xf32> to vector<8x128xf32>
    %cst_21 = arith.constant 0.000000e+00 : f32
    %48 = vector.broadcast %cst_21 : f32 to vector<8x128xf32>
    %49 = arith.select %45, %47, %48 : vector<8x128xi1>, vector<8x128xf32>
    %50 = arith.addf %43, %49 : vector<8x128xf32>
    %c1_i32 = arith.constant 1 : i32
    %51 = vector.broadcast %c1_i32 : i32 to vector<8x128xi32>
    %52 = arith.cmpi eq, %6, %51 : vector<8x128xi32>
    %53 = vector.extract_strided_slice %4 {offsets = [1, 0, 0], sizes = [1, 8, 128], strides = [1, 1, 1]} : vector<8x8x128xf32> to vector<1x8x128xf32>
    %54 = vector.shape_cast %53 : vector<1x8x128xf32> to vector<8x128xf32>
    %cst_22 = arith.constant 0.000000e+00 : f32
    %55 = vector.broadcast %cst_22 : f32 to vector<8x128xf32>
    %56 = arith.select %52, %54, %55 : vector<8x128xi1>, vector<8x128xf32>
    %57 = arith.addf %50, %56 : vector<8x128xf32>
    %c2_i32 = arith.constant 2 : i32
    %58 = vector.broadcast %c2_i32 : i32 to vector<8x128xi32>
    %59 = arith.cmpi eq, %6, %58 : vector<8x128xi32>
    %60 = vector.extract_strided_slice %4 {offsets = [2, 0, 0], sizes = [1, 8, 128], strides = [1, 1, 1]} : vector<8x8x128xf32> to vector<1x8x128xf32>
    %61 = vector.shape_cast %60 : vector<1x8x128xf32> to vector<8x128xf32>
    %cst_23 = arith.constant 0.000000e+00 : f32
    %62 = vector.broadcast %cst_23 : f32 to vector<8x128xf32>
    %63 = arith.select %59, %61, %62 : vector<8x128xi1>, vector<8x128xf32>
    %64 = arith.addf %57, %63 : vector<8x128xf32>
    %c3_i32 = arith.constant 3 : i32
    %65 = vector.broadcast %c3_i32 : i32 to vector<8x128xi32>
    %66 = arith.cmpi eq, %6, %65 : vector<8x128xi32>
    %67 = vector.extract_strided_slice %4 {offsets = [3, 0, 0], sizes = [1, 8, 128], strides = [1, 1, 1]} : vector<8x8x128xf32> to vector<1x8x128xf32>
    %68 = vector.shape_cast %67 : vector<1x8x128xf32> to vector<8x128xf32>
    %cst_24 = arith.constant 0.000000e+00 : f32
    %69 = vector.broadcast %cst_24 : f32 to vector<8x128xf32>
    %70 = arith.select %66, %68, %69 : vector<8x128xi1>, vector<8x128xf32>
    %71 = arith.addf %64, %70 : vector<8x128xf32>
    %c4_i32 = arith.constant 4 : i32
    %72 = vector.broadcast %c4_i32 : i32 to vector<8x128xi32>
    %73 = arith.cmpi eq, %6, %72 : vector<8x128xi32>
    %74 = vector.extract_strided_slice %4 {offsets = [4, 0, 0], sizes = [1, 8, 128], strides = [1, 1, 1]} : vector<8x8x128xf32> to vector<1x8x128xf32>
    %75 = vector.shape_cast %74 : vector<1x8x128xf32> to vector<8x128xf32>
    %cst_25 = arith.constant 0.000000e+00 : f32
    %76 = vector.broadcast %cst_25 : f32 to vector<8x128xf32>
    %77 = arith.select %73, %75, %76 : vector<8x128xi1>, vector<8x128xf32>
    %78 = arith.addf %71, %77 : vector<8x128xf32>
    %c5_i32 = arith.constant 5 : i32
    %79 = vector.broadcast %c5_i32 : i32 to vector<8x128xi32>
    %80 = arith.cmpi eq, %6, %79 : vector<8x128xi32>
    %81 = vector.extract_strided_slice %4 {offsets = [5, 0, 0], sizes = [1, 8, 128], strides = [1, 1, 1]} : vector<8x8x128xf32> to vector<1x8x128xf32>
    %82 = vector.shape_cast %81 : vector<1x8x128xf32> to vector<8x128xf32>
    %cst_26 = arith.constant 0.000000e+00 : f32
    %83 = vector.broadcast %cst_26 : f32 to vector<8x128xf32>
    %84 = arith.select %80, %82, %83 : vector<8x128xi1>, vector<8x128xf32>
    %85 = arith.addf %78, %84 : vector<8x128xf32>
    %c6_i32 = arith.constant 6 : i32
    %86 = vector.broadcast %c6_i32 : i32 to vector<8x128xi32>
    %87 = arith.cmpi eq, %6, %86 : vector<8x128xi32>
    %88 = vector.extract_strided_slice %4 {offsets = [6, 0, 0], sizes = [1, 8, 128], strides = [1, 1, 1]} : vector<8x8x128xf32> to vector<1x8x128xf32>
    %89 = vector.shape_cast %88 : vector<1x8x128xf32> to vector<8x128xf32>
    %cst_27 = arith.constant 0.000000e+00 : f32
    %90 = vector.broadcast %cst_27 : f32 to vector<8x128xf32>
    %91 = arith.select %87, %89, %90 : vector<8x128xi1>, vector<8x128xf32>
    %92 = arith.addf %85, %91 : vector<8x128xf32>
    %c7_i32 = arith.constant 7 : i32
    %93 = vector.broadcast %c7_i32 : i32 to vector<8x128xi32>
    %94 = arith.cmpi eq, %6, %93 : vector<8x128xi32>
    %95 = vector.extract_strided_slice %4 {offsets = [7, 0, 0], sizes = [1, 8, 128], strides = [1, 1, 1]} : vector<8x8x128xf32> to vector<1x8x128xf32>
    %96 = vector.shape_cast %95 : vector<1x8x128xf32> to vector<8x128xf32>
    %cst_28 = arith.constant 0.000000e+00 : f32
    %97 = vector.broadcast %cst_28 : f32 to vector<8x128xf32>
    %98 = arith.select %94, %96, %97 : vector<8x128xi1>, vector<8x128xf32>
    %99 = arith.addf %92, %98 : vector<8x128xf32>
    %100 = arith.subf %42, %99 : vector<8x128xf32>
    %c1 = arith.constant 1 : index
    %101 = memref.load %arg7[%c1] : memref<3xf32, #tpu.memory_space<smem>>
    %102 = arith.mulf %100, %10 : vector<8x128xf32>
    %103 = vector.shape_cast %102 : vector<8x128xf32> to vector<1x8x128xf32>
    %cst_29 = arith.constant dense<0.000000e+00> : vector<1xf32>
    %104 = vector.multi_reduction <add>, %103, %cst_29 [1, 2] : vector<1x8x128xf32> to vector<1xf32>
    %105 = vector.shape_cast %104 : vector<1xf32> to vector<1x1x1xf32>
    %106 = vector.extract %105[0, 0, 0] : f32 from vector<1x1x1xf32>
    %107 = arith.addf %101, %106 : f32
    %c1_30 = arith.constant 1 : index
    %108 = memref.load %arg7[%c1_30] : memref<3xf32, #tpu.memory_space<smem>>
    memref.store %107, %arg7[%c1_30] : memref<3xf32, #tpu.memory_space<smem>>
    %c2 = arith.constant 2 : index
    %109 = memref.load %arg7[%c2] : memref<3xf32, #tpu.memory_space<smem>>
    %110 = vector.shape_cast %10 : vector<8x128xf32> to vector<1x8x128xf32>
    %cst_31 = arith.constant dense<0.000000e+00> : vector<1xf32>
    %111 = vector.multi_reduction <add>, %110, %cst_31 [1, 2] : vector<1x8x128xf32> to vector<1xf32>
    %112 = vector.shape_cast %111 : vector<1xf32> to vector<1x1x1xf32>
    %113 = vector.extract %112[0, 0, 0] : f32 from vector<1x1x1xf32>
    %114 = arith.addf %109, %113 : f32
    %c2_32 = arith.constant 2 : index
    %115 = memref.load %arg7[%c2_32] : memref<3xf32, #tpu.memory_space<smem>>
    memref.store %114, %arg7[%c2_32] : memref<3xf32, #tpu.memory_space<smem>>
    %116 = tpu.iota {dimensions = array<i32: 0>} : vector<8x128xi32>
    %117 = tpu.iota {dimensions = array<i32: 1>} : vector<8x128xi32>
    %c128_i32 = arith.constant 128 : i32
    %118 = arith.muli %arg1, %c128_i32 : i32
    %119 = vector.broadcast %118 : i32 to vector<8x128xi32>
    %120 = arith.addi %117, %119 : vector<8x128xi32>
    %c128_i32_33 = arith.constant 128 : i32
    %121 = vector.broadcast %c128_i32_33 : i32 to vector<8x128xi32>
    %122 = arith.muli %116, %121 : vector<8x128xi32>
    %123 = arith.addi %122, %120 : vector<8x128xi32>
    %c128_i32_34 = arith.constant 128 : i32
    %124 = vector.broadcast %c128_i32_34 : i32 to vector<8x128xi32>
    %125 = arith.cmpi slt, %123, %124 : vector<8x128xi32>
    %cst_35 = arith.constant dense<true> : vector<8x128xi1>
    %126 = arith.xori %8, %cst_35 : vector<8x128xi1>
    %127 = arith.andi %125, %126 : vector<8x128xi1>
    %cst_36 = arith.constant 0.000000e+00 : f32
    %128 = vector.broadcast %cst_36 : f32 to vector<8x128xf32>
    %129 = arith.select %127, %100, %128 : vector<8x128xi1>, vector<8x128xf32>
    %c128_i32_37 = arith.constant 128 : i32
    %130 = arith.muli %arg1, %c128_i32_37 : i32
    %131 = tpu.assume_multiple %130, 128 : i32
    %c0_38 = arith.constant 0 : index
    %132 = arith.index_cast %131 : i32 to index
    %133 = vector.load %arg6[%c0_38, %132] : memref<8x128xf32, #tpu.memory_space<vmem>>, vector<8x128xf32>
    tpu.vector_store %arg6[%c0_38, %132], %129 {strides = array<i32>} : memref<8x128xf32, #tpu.memory_space<vmem>>, vector<8x128xf32>,
    %c0_i32_39 = arith.constant 0 : i32
    %134 = arith.cmpi eq, %arg1, %c0_i32_39 : i32
    %135 = arith.extui %134 : i1 to i32
    %c0_i32_40 = arith.constant 0 : i32
    %136 = arith.cmpi ne, %135, %c0_i32_40 : i32
    scf.if %136 {
      %c0_41 = arith.constant 0 : index
      %c0_42 = arith.constant 0 : index
      %137 = vector.load %arg6[%c0_41, %c0_42] : memref<8x128xf32, #tpu.memory_space<vmem>>, vector<8x128xf32>
      %c2_43 = arith.constant 2 : index
      %138 = memref.load %arg7[%c2_43] : memref<3xf32, #tpu.memory_space<smem>>
      %cst_44 = arith.constant 3.000000e+00 : f32
      %139 = arith.mulf %138, %cst_44 : f32
      %cst_45 = arith.constant 1.280000e+02 : f32
      %140 = arith.minimumf %139, %cst_45 : f32
      %cst_46 = arith.constant dense<0xFF800000> : vector<8xf32>
      %141 = vector.multi_reduction <maximumf>, %137, %cst_46 [1] : vector<8x128xf32> to vector<8xf32>
      %142 = vector.shape_cast %141 : vector<8xf32> to vector<8x1xf32>
      %cst_47 = arith.constant dense<0xFF800000> : vector<1xf32>
      %143 = vector.multi_reduction <maximumf>, %142, %cst_47 [0] : vector<8x1xf32> to vector<1xf32>
      %144 = vector.shape_cast %143 : vector<1xf32> to vector<1x1xf32>
      %cst_48 = arith.constant 9.99999997E-7 : f32
      %145 = vector.broadcast %cst_48 : f32 to vector<1x1xf32>
      %146 = arith.addf %144, %145 : vector<1x1xf32>
      %cst_49 = arith.constant -9.99999997E-7 : f32
      %147 = vector.broadcast %cst_49 : f32 to vector<1x1xf32>
      %c0_i32_50 = arith.constant 0 : i32
      %148 = arith.addf %147, %146 : vector<1x1xf32>
      %cst_51 = arith.constant 5.000000e-01 : f32
      %149 = vector.broadcast %cst_51 : f32 to vector<1x1xf32>
      %150 = arith.mulf %149, %148 : vector<1x1xf32>
      %151 = vector.broadcast %150 : vector<1x1xf32> to vector<8x128xf32>
      %152 = arith.cmpf ogt, %137, %151 : vector<8x128xf32>
      %153 = arith.extui %152 : vector<8x128xi1> to vector<8x128xi32>
      %154 = arith.sitofp %153 : vector<8x128xi32> to vector<8x128xf32>
      %cst_52 = arith.constant dense<0.000000e+00> : vector<8xf32>
      %155 = vector.multi_reduction <add>, %154, %cst_52 [1] : vector<8x128xf32> to vector<8xf32>
      %156 = vector.shape_cast %155 : vector<8xf32> to vector<8x1xf32>
      %cst_53 = arith.constant dense<0.000000e+00> : vector<1xf32>
      %157 = vector.multi_reduction <add>, %156, %cst_53 [0] : vector<8x1xf32> to vector<1xf32>
      %158 = vector.shape_cast %157 : vector<1xf32> to vector<1x1xf32>
      %159 = vector.broadcast %140 : f32 to vector<1x1xf32>
      %160 = arith.cmpf oge, %158, %159 : vector<1x1xf32>
      %161 = arith.select %160, %150, %147 : vector<1x1xi1>, vector<1x1xf32>
      %162 = arith.select %160, %146, %150 : vector<1x1xi1>, vector<1x1xf32>
      %c1_i32_54 = arith.constant 1 : i32
      %163 = arith.addf %161, %162 : vector<1x1xf32>
      %cst_55 = arith.constant 5.000000e-01 : f32
      %164 = vector.broadcast %cst_55 : f32 to vector<1x1xf32>
      %165 = arith.mulf %164, %163 : vector<1x1xf32>
      %166 = vector.broadcast %165 : vector<1x1xf32> to vector<8x128xf32>
      %167 = arith.cmpf ogt, %137, %166 : vector<8x128xf32>
      %168 = arith.extui %167 : vector<8x128xi1> to vector<8x128xi32>
      %169 = arith.sitofp %168 : vector<8x128xi32> to vector<8x128xf32>
      %cst_56 = arith.constant dense<0.000000e+00> : vector<8xf32>
      %170 = vector.multi_reduction <add>, %169, %cst_56 [1] : vector<8x128xf32> to vector<8xf32>
      %171 = vector.shape_cast %170 : vector<8xf32> to vector<8x1xf32>
      %cst_57 = arith.constant dense<0.000000e+00> : vector<1xf32>
      %172 = vector.multi_reduction <add>, %171, %cst_57 [0] : vector<8x1xf32> to vector<1xf32>
      %173 = vector.shape_cast %172 : vector<1xf32> to vector<1x1xf32>
      %174 = vector.broadcast %140 : f32 to vector<1x1xf32>
      %175 = arith.cmpf oge, %173, %174 : vector<1x1xf32>
      %176 = arith.select %175, %165, %161 : vector<1x1xi1>, vector<1x1xf32>
      %177 = arith.select %175, %162, %165 : vector<1x1xi1>, vector<1x1xf32>
      %c2_i32_58 = arith.constant 2 : i32
      %178 = arith.addf %176, %177 : vector<1x1xf32>
      %cst_59 = arith.constant 5.000000e-01 : f32
      %179 = vector.broadcast %cst_59 : f32 to vector<1x1xf32>
      %180 = arith.mulf %179, %178 : vector<1x1xf32>
      %181 = vector.broadcast %180 : vector<1x1xf32> to vector<8x128xf32>
      %182 = arith.cmpf ogt, %137, %181 : vector<8x128xf32>
      %183 = arith.extui %182 : vector<8x128xi1> to vector<8x128xi32>
      %184 = arith.sitofp %183 : vector<8x128xi32> to vector<8x128xf32>
      %cst_60 = arith.constant dense<0.000000e+00> : vector<8xf32>
      %185 = vector.multi_reduction <add>, %184, %cst_60 [1] : vector<8x128xf32> to vector<8xf32>
      %186 = vector.shape_cast %185 : vector<8xf32> to vector<8x1xf32>
      %cst_61 = arith.constant dense<0.000000e+00> : vector<1xf32>
      %187 = vector.multi_reduction <add>, %186, %cst_61 [0] : vector<8x1xf32> to vector<1xf32>
      %188 = vector.shape_cast %187 : vector<1xf32> to vector<1x1xf32>
      %189 = vector.broadcast %140 : f32 to vector<1x1xf32>
      %190 = arith.cmpf oge, %188, %189 : vector<1x1xf32>
      %191 = arith.select %190, %180, %176 : vector<1x1xi1>, vector<1x1xf32>
      %192 = arith.select %190, %177, %180 : vector<1x1xi1>, vector<1x1xf32>
      %c3_i32_62 = arith.constant 3 : i32
      %193 = arith.addf %191, %192 : vector<1x1xf32>
      %cst_63 = arith.constant 5.000000e-01 : f32
      %194 = vector.broadcast %cst_63 : f32 to vector<1x1xf32>
      %195 = arith.mulf %194, %193 : vector<1x1xf32>
      %196 = vector.broadcast %195 : vector<1x1xf32> to vector<8x128xf32>
      %197 = arith.cmpf ogt, %137, %196 : vector<8x128xf32>
      %198 = arith.extui %197 : vector<8x128xi1> to vector<8x128xi32>
      %199 = arith.sitofp %198 : vector<8x128xi32> to vector<8x128xf32>
      %cst_64 = arith.constant dense<0.000000e+00> : vector<8xf32>
      %200 = vector.multi_reduction <add>, %199, %cst_64 [1] : vector<8x128xf32> to vector<8xf32>
      %201 = vector.shape_cast %200 : vector<8xf32> to vector<8x1xf32>
      %cst_65 = arith.constant dense<0.000000e+00> : vector<1xf32>
      %202 = vector.multi_reduction <add>, %201, %cst_65 [0] : vector<8x1xf32> to vector<1xf32>
      %203 = vector.shape_cast %202 : vector<1xf32> to vector<1x1xf32>
      %204 = vector.broadcast %140 : f32 to vector<1x1xf32>
      %205 = arith.cmpf oge, %203, %204 : vector<1x1xf32>
      %206 = arith.select %205, %195, %191 : vector<1x1xi1>, vector<1x1xf32>
      %207 = arith.select %205, %192, %195 : vector<1x1xi1>, vector<1x1xf32>
      %c4_i32_66 = arith.constant 4 : i32
      %208 = arith.addf %206, %207 : vector<1x1xf32>
      %cst_67 = arith.constant 5.000000e-01 : f32
      %209 = vector.broadcast %cst_67 : f32 to vector<1x1xf32>
      %210 = arith.mulf %209, %208 : vector<1x1xf32>
      %211 = vector.broadcast %210 : vector<1x1xf32> to vector<8x128xf32>
      %212 = arith.cmpf ogt, %137, %211 : vector<8x128xf32>
      %213 = arith.extui %212 : vector<8x128xi1> to vector<8x128xi32>
      %214 = arith.sitofp %213 : vector<8x128xi32> to vector<8x128xf32>
      %cst_68 = arith.constant dense<0.000000e+00> : vector<8xf32>
      %215 = vector.multi_reduction <add>, %214, %cst_68 [1] : vector<8x128xf32> to vector<8xf32>
      %216 = vector.shape_cast %215 : vector<8xf32> to vector<8x1xf32>
      %cst_69 = arith.constant dense<0.000000e+00> : vector<1xf32>
      %217 = vector.multi_reduction <add>, %216, %cst_69 [0] : vector<8x1xf32> to vector<1xf32>
      %218 = vector.shape_cast %217 : vector<1xf32> to vector<1x1xf32>
      %219 = vector.broadcast %140 : f32 to vector<1x1xf32>
      %220 = arith.cmpf oge, %218, %219 : vector<1x1xf32>
      %221 = arith.select %220, %210, %206 : vector<1x1xi1>, vector<1x1xf32>
      %222 = arith.select %220, %207, %210 : vector<1x1xi1>, vector<1x1xf32>
      %c5_i32_70 = arith.constant 5 : i32
      %223 = arith.addf %221, %222 : vector<1x1xf32>
      %cst_71 = arith.constant 5.000000e-01 : f32
      %224 = vector.broadcast %cst_71 : f32 to vector<1x1xf32>
      %225 = arith.mulf %224, %223 : vector<1x1xf32>
      %226 = vector.broadcast %225 : vector<1x1xf32> to vector<8x128xf32>
      %227 = arith.cmpf ogt, %137, %226 : vector<8x128xf32>
      %228 = arith.extui %227 : vector<8x128xi1> to vector<8x128xi32>
      %229 = arith.sitofp %228 : vector<8x128xi32> to vector<8x128xf32>
      %cst_72 = arith.constant dense<0.000000e+00> : vector<8xf32>
      %230 = vector.multi_reduction <add>, %229, %cst_72 [1] : vector<8x128xf32> to vector<8xf32>
      %231 = vector.shape_cast %230 : vector<8xf32> to vector<8x1xf32>
      %cst_73 = arith.constant dense<0.000000e+00> : vector<1xf32>
      %232 = vector.multi_reduction <add>, %231, %cst_73 [0] : vector<8x1xf32> to vector<1xf32>
      %233 = vector.shape_cast %232 : vector<1xf32> to vector<1x1xf32>
      %234 = vector.broadcast %140 : f32 to vector<1x1xf32>
      %235 = arith.cmpf oge, %233, %234 : vector<1x1xf32>
      %236 = arith.select %235, %225, %221 : vector<1x1xi1>, vector<1x1xf32>
      %237 = arith.select %235, %222, %225 : vector<1x1xi1>, vector<1x1xf32>
      %c6_i32_74 = arith.constant 6 : i32
      %238 = arith.addf %236, %237 : vector<1x1xf32>
      %cst_75 = arith.constant 5.000000e-01 : f32
      %239 = vector.broadcast %cst_75 : f32 to vector<1x1xf32>
      %240 = arith.mulf %239, %238 : vector<1x1xf32>
      %241 = vector.broadcast %240 : vector<1x1xf32> to vector<8x128xf32>
      %242 = arith.cmpf ogt, %137, %241 : vector<8x128xf32>
      %243 = arith.extui %242 : vector<8x128xi1> to vector<8x128xi32>
      %244 = arith.sitofp %243 : vector<8x128xi32> to vector<8x128xf32>
      %cst_76 = arith.constant dense<0.000000e+00> : vector<8xf32>
      %245 = vector.multi_reduction <add>, %244, %cst_76 [1] : vector<8x128xf32> to vector<8xf32>
      %246 = vector.shape_cast %245 : vector<8xf32> to vector<8x1xf32>
      %cst_77 = arith.constant dense<0.000000e+00> : vector<1xf32>
      %247 = vector.multi_reduction <add>, %246, %cst_77 [0] : vector<8x1xf32> to vector<1xf32>
      %248 = vector.shape_cast %247 : vector<1xf32> to vector<1x1xf32>
      %249 = vector.broadcast %140 : f32 to vector<1x1xf32>
      %250 = arith.cmpf oge, %248, %249 : vector<1x1xf32>
      %251 = arith.select %250, %240, %236 : vector<1x1xi1>, vector<1x1xf32>
      %252 = arith.select %250, %237, %240 : vector<1x1xi1>, vector<1x1xf32>
      %c7_i32_78 = arith.constant 7 : i32
      %253 = arith.addf %251, %252 : vector<1x1xf32>
      %cst_79 = arith.constant 5.000000e-01 : f32
      %254 = vector.broadcast %cst_79 : f32 to vector<1x1xf32>
      %255 = arith.mulf %254, %253 : vector<1x1xf32>
      %256 = vector.broadcast %255 : vector<1x1xf32> to vector<8x128xf32>
      %257 = arith.cmpf ogt, %137, %256 : vector<8x128xf32>
      %258 = arith.extui %257 : vector<8x128xi1> to vector<8x128xi32>
      %259 = arith.sitofp %258 : vector<8x128xi32> to vector<8x128xf32>
      %cst_80 = arith.constant dense<0.000000e+00> : vector<8xf32>
      %260 = vector.multi_reduction <add>, %259, %cst_80 [1] : vector<8x128xf32> to vector<8xf32>
      %261 = vector.shape_cast %260 : vector<8xf32> to vector<8x1xf32>
      %cst_81 = arith.constant dense<0.000000e+00> : vector<1xf32>
      %262 = vector.multi_reduction <add>, %261, %cst_81 [0] : vector<8x1xf32> to vector<1xf32>
      %263 = vector.shape_cast %262 : vector<1xf32> to vector<1x1xf32>
      %264 = vector.broadcast %140 : f32 to vector<1x1xf32>
      %265 = arith.cmpf oge, %263, %264 : vector<1x1xf32>
      %266 = arith.select %265, %255, %251 : vector<1x1xi1>, vector<1x1xf32>
      %267 = arith.select %265, %252, %255 : vector<1x1xi1>, vector<1x1xf32>
      %c8_i32 = arith.constant 8 : i32
      %268 = arith.addf %266, %267 : vector<1x1xf32>
      %cst_82 = arith.constant 5.000000e-01 : f32
      %269 = vector.broadcast %cst_82 : f32 to vector<1x1xf32>
      %270 = arith.mulf %269, %268 : vector<1x1xf32>
      %271 = vector.broadcast %270 : vector<1x1xf32> to vector<8x128xf32>
      %272 = arith.cmpf ogt, %137, %271 : vector<8x128xf32>
      %273 = arith.extui %272 : vector<8x128xi1> to vector<8x128xi32>
      %274 = arith.sitofp %273 : vector<8x128xi32> to vector<8x128xf32>
      %cst_83 = arith.constant dense<0.000000e+00> : vector<8xf32>
      %275 = vector.multi_reduction <add>, %274, %cst_83 [1] : vector<8x128xf32> to vector<8xf32>
      %276 = vector.shape_cast %275 : vector<8xf32> to vector<8x1xf32>
      %cst_84 = arith.constant dense<0.000000e+00> : vector<1xf32>
      %277 = vector.multi_reduction <add>, %276, %cst_84 [0] : vector<8x1xf32> to vector<1xf32>
      %278 = vector.shape_cast %277 : vector<1xf32> to vector<1x1xf32>
      %279 = vector.broadcast %140 : f32 to vector<1x1xf32>
      %280 = arith.cmpf oge, %278, %279 : vector<1x1xf32>
      %281 = arith.select %280, %270, %266 : vector<1x1xi1>, vector<1x1xf32>
      %282 = arith.select %280, %267, %270 : vector<1x1xi1>, vector<1x1xf32>
      %c9_i32 = arith.constant 9 : i32
      %283 = arith.addf %281, %282 : vector<1x1xf32>
      %cst_85 = arith.constant 5.000000e-01 : f32
      %284 = vector.broadcast %cst_85 : f32 to vector<1x1xf32>
      %285 = arith.mulf %284, %283 : vector<1x1xf32>
      %286 = vector.broadcast %285 : vector<1x1xf32> to vector<8x128xf32>
      %287 = arith.cmpf ogt, %137, %286 : vector<8x128xf32>
      %288 = arith.extui %287 : vector<8x128xi1> to vector<8x128xi32>
      %289 = arith.sitofp %288 : vector<8x128xi32> to vector<8x128xf32>
      %cst_86 = arith.constant dense<0.000000e+00> : vector<8xf32>
      %290 = vector.multi_reduction <add>, %289, %cst_86 [1] : vector<8x128xf32> to vector<8xf32>
      %291 = vector.shape_cast %290 : vector<8xf32> to vector<8x1xf32>
      %cst_87 = arith.constant dense<0.000000e+00> : vector<1xf32>
      %292 = vector.multi_reduction <add>, %291, %cst_87 [0] : vector<8x1xf32> to vector<1xf32>
      %293 = vector.shape_cast %292 : vector<1xf32> to vector<1x1xf32>
      %294 = vector.broadcast %140 : f32 to vector<1x1xf32>
      %295 = arith.cmpf oge, %293, %294 : vector<1x1xf32>
      %296 = arith.select %295, %285, %281 : vector<1x1xi1>, vector<1x1xf32>
      %297 = arith.select %295, %282, %285 : vector<1x1xi1>, vector<1x1xf32>
      %c10_i32 = arith.constant 10 : i32
      %298 = arith.addf %296, %297 : vector<1x1xf32>
      %cst_88 = arith.constant 5.000000e-01 : f32
      %299 = vector.broadcast %cst_88 : f32 to vector<1x1xf32>
      %300 = arith.mulf %299, %298 : vector<1x1xf32>
      %301 = vector.broadcast %300 : vector<1x1xf32> to vector<8x128xf32>
      %302 = arith.cmpf ogt, %137, %301 : vector<8x128xf32>
      %303 = arith.extui %302 : vector<8x128xi1> to vector<8x128xi32>
      %304 = arith.sitofp %303 : vector<8x128xi32> to vector<8x128xf32>
      %cst_89 = arith.constant dense<0.000000e+00> : vector<8xf32>
      %305 = vector.multi_reduction <add>, %304, %cst_89 [1] : vector<8x128xf32> to vector<8xf32>
      %306 = vector.shape_cast %305 : vector<8xf32> to vector<8x1xf32>
      %cst_90 = arith.constant dense<0.000000e+00> : vector<1xf32>
      %307 = vector.multi_reduction <add>, %306, %cst_90 [0] : vector<8x1xf32> to vector<1xf32>
      %308 = vector.shape_cast %307 : vector<1xf32> to vector<1x1xf32>
      %309 = vector.broadcast %140 : f32 to vector<1x1xf32>
      %310 = arith.cmpf oge, %308, %309 : vector<1x1xf32>
      %311 = arith.select %310, %300, %296 : vector<1x1xi1>, vector<1x1xf32>
      %312 = arith.select %310, %297, %300 : vector<1x1xi1>, vector<1x1xf32>
      %c11_i32 = arith.constant 11 : i32
      %313 = arith.addf %311, %312 : vector<1x1xf32>
      %cst_91 = arith.constant 5.000000e-01 : f32
      %314 = vector.broadcast %cst_91 : f32 to vector<1x1xf32>
      %315 = arith.mulf %314, %313 : vector<1x1xf32>
      %316 = vector.broadcast %315 : vector<1x1xf32> to vector<8x128xf32>
      %317 = arith.cmpf ogt, %137, %316 : vector<8x128xf32>
      %318 = arith.extui %317 : vector<8x128xi1> to vector<8x128xi32>
      %319 = arith.sitofp %318 : vector<8x128xi32> to vector<8x128xf32>
      %cst_92 = arith.constant dense<0.000000e+00> : vector<8xf32>
      %320 = vector.multi_reduction <add>, %319, %cst_92 [1] : vector<8x128xf32> to vector<8xf32>
      %321 = vector.shape_cast %320 : vector<8xf32> to vector<8x1xf32>
      %cst_93 = arith.constant dense<0.000000e+00> : vector<1xf32>
      %322 = vector.multi_reduction <add>, %321, %cst_93 [0] : vector<8x1xf32> to vector<1xf32>
      %323 = vector.shape_cast %322 : vector<1xf32> to vector<1x1xf32>
      %324 = vector.broadcast %140 : f32 to vector<1x1xf32>
      %325 = arith.cmpf oge, %323, %324 : vector<1x1xf32>
      %326 = arith.select %325, %315, %311 : vector<1x1xi1>, vector<1x1xf32>
      %327 = arith.select %325, %312, %315 : vector<1x1xi1>, vector<1x1xf32>
      %c12_i32 = arith.constant 12 : i32
      %328 = arith.addf %326, %327 : vector<1x1xf32>
      %cst_94 = arith.constant 5.000000e-01 : f32
      %329 = vector.broadcast %cst_94 : f32 to vector<1x1xf32>
      %330 = arith.mulf %329, %328 : vector<1x1xf32>
      %331 = vector.broadcast %330 : vector<1x1xf32> to vector<8x128xf32>
      %332 = arith.cmpf ogt, %137, %331 : vector<8x128xf32>
      %333 = arith.extui %332 : vector<8x128xi1> to vector<8x128xi32>
      %334 = arith.sitofp %333 : vector<8x128xi32> to vector<8x128xf32>
      %cst_95 = arith.constant dense<0.000000e+00> : vector<8xf32>
      %335 = vector.multi_reduction <add>, %334, %cst_95 [1] : vector<8x128xf32> to vector<8xf32>
      %336 = vector.shape_cast %335 : vector<8xf32> to vector<8x1xf32>
      %cst_96 = arith.constant dense<0.000000e+00> : vector<1xf32>
      %337 = vector.multi_reduction <add>, %336, %cst_96 [0] : vector<8x1xf32> to vector<1xf32>
      %338 = vector.shape_cast %337 : vector<1xf32> to vector<1x1xf32>
      %339 = vector.broadcast %140 : f32 to vector<1x1xf32>
      %340 = arith.cmpf oge, %338, %339 : vector<1x1xf32>
      %341 = arith.select %340, %330, %326 : vector<1x1xi1>, vector<1x1xf32>
      %342 = arith.select %340, %327, %330 : vector<1x1xi1>, vector<1x1xf32>
      %c13_i32 = arith.constant 13 : i32
      %343 = arith.addf %341, %342 : vector<1x1xf32>
      %cst_97 = arith.constant 5.000000e-01 : f32
      %344 = vector.broadcast %cst_97 : f32 to vector<1x1xf32>
      %345 = arith.mulf %344, %343 : vector<1x1xf32>
      %346 = vector.broadcast %345 : vector<1x1xf32> to vector<8x128xf32>
      %347 = arith.cmpf ogt, %137, %346 : vector<8x128xf32>
      %348 = arith.extui %347 : vector<8x128xi1> to vector<8x128xi32>
      %349 = arith.sitofp %348 : vector<8x128xi32> to vector<8x128xf32>
      %cst_98 = arith.constant dense<0.000000e+00> : vector<8xf32>
      %350 = vector.multi_reduction <add>, %349, %cst_98 [1] : vector<8x128xf32> to vector<8xf32>
      %351 = vector.shape_cast %350 : vector<8xf32> to vector<8x1xf32>
      %cst_99 = arith.constant dense<0.000000e+00> : vector<1xf32>
      %352 = vector.multi_reduction <add>, %351, %cst_99 [0] : vector<8x1xf32> to vector<1xf32>
      %353 = vector.shape_cast %352 : vector<1xf32> to vector<1x1xf32>
      %354 = vector.broadcast %140 : f32 to vector<1x1xf32>
      %355 = arith.cmpf oge, %353, %354 : vector<1x1xf32>
      %356 = arith.select %355, %345, %341 : vector<1x1xi1>, vector<1x1xf32>
      %357 = arith.select %355, %342, %345 : vector<1x1xi1>, vector<1x1xf32>
      %c14_i32 = arith.constant 14 : i32
      %358 = arith.addf %356, %357 : vector<1x1xf32>
      %cst_100 = arith.constant 5.000000e-01 : f32
      %359 = vector.broadcast %cst_100 : f32 to vector<1x1xf32>
      %360 = arith.mulf %359, %358 : vector<1x1xf32>
      %361 = vector.broadcast %360 : vector<1x1xf32> to vector<8x128xf32>
      %362 = arith.cmpf ogt, %137, %361 : vector<8x128xf32>
      %363 = arith.extui %362 : vector<8x128xi1> to vector<8x128xi32>
      %364 = arith.sitofp %363 : vector<8x128xi32> to vector<8x128xf32>
      %cst_101 = arith.constant dense<0.000000e+00> : vector<8xf32>
      %365 = vector.multi_reduction <add>, %364, %cst_101 [1] : vector<8x128xf32> to vector<8xf32>
      %366 = vector.shape_cast %365 : vector<8xf32> to vector<8x1xf32>
      %cst_102 = arith.constant dense<0.000000e+00> : vector<1xf32>
      %367 = vector.multi_reduction <add>, %366, %cst_102 [0] : vector<8x1xf32> to vector<1xf32>
      %368 = vector.shape_cast %367 : vector<1xf32> to vector<1x1xf32>
      %369 = vector.broadcast %140 : f32 to vector<1x1xf32>
      %370 = arith.cmpf oge, %368, %369 : vector<1x1xf32>
      %371 = arith.select %370, %360, %356 : vector<1x1xi1>, vector<1x1xf32>
      %372 = arith.select %370, %357, %360 : vector<1x1xi1>, vector<1x1xf32>
      %c15_i32 = arith.constant 15 : i32
      %373 = arith.addf %371, %372 : vector<1x1xf32>
      %cst_103 = arith.constant 5.000000e-01 : f32
      %374 = vector.broadcast %cst_103 : f32 to vector<1x1xf32>
      %375 = arith.mulf %374, %373 : vector<1x1xf32>
      %376 = vector.broadcast %375 : vector<1x1xf32> to vector<8x128xf32>
      %377 = arith.cmpf ogt, %137, %376 : vector<8x128xf32>
      %378 = arith.extui %377 : vector<8x128xi1> to vector<8x128xi32>
      %379 = arith.sitofp %378 : vector<8x128xi32> to vector<8x128xf32>
      %cst_104 = arith.constant dense<0.000000e+00> : vector<8xf32>
      %380 = vector.multi_reduction <add>, %379, %cst_104 [1] : vector<8x128xf32> to vector<8xf32>
      %381 = vector.shape_cast %380 : vector<8xf32> to vector<8x1xf32>
      %cst_105 = arith.constant dense<0.000000e+00> : vector<1xf32>
      %382 = vector.multi_reduction <add>, %381, %cst_105 [0] : vector<8x1xf32> to vector<1xf32>
      %383 = vector.shape_cast %382 : vector<1xf32> to vector<1x1xf32>
      %384 = vector.broadcast %140 : f32 to vector<1x1xf32>
      %385 = arith.cmpf oge, %383, %384 : vector<1x1xf32>
      %386 = arith.select %385, %375, %371 : vector<1x1xi1>, vector<1x1xf32>
      %387 = arith.select %385, %372, %375 : vector<1x1xi1>, vector<1x1xf32>
      %c16_i32 = arith.constant 16 : i32
      %388 = arith.addf %386, %387 : vector<1x1xf32>
      %cst_106 = arith.constant 5.000000e-01 : f32
      %389 = vector.broadcast %cst_106 : f32 to vector<1x1xf32>
      %390 = arith.mulf %389, %388 : vector<1x1xf32>
      %391 = vector.broadcast %390 : vector<1x1xf32> to vector<8x128xf32>
      %392 = arith.cmpf ogt, %137, %391 : vector<8x128xf32>
      %393 = arith.extui %392 : vector<8x128xi1> to vector<8x128xi32>
      %394 = arith.sitofp %393 : vector<8x128xi32> to vector<8x128xf32>
      %cst_107 = arith.constant dense<0.000000e+00> : vector<8xf32>
      %395 = vector.multi_reduction <add>, %394, %cst_107 [1] : vector<8x128xf32> to vector<8xf32>
      %396 = vector.shape_cast %395 : vector<8xf32> to vector<8x1xf32>
      %cst_108 = arith.constant dense<0.000000e+00> : vector<1xf32>
      %397 = vector.multi_reduction <add>, %396, %cst_108 [0] : vector<8x1xf32> to vector<1xf32>
      %398 = vector.shape_cast %397 : vector<1xf32> to vector<1x1xf32>
      %399 = vector.broadcast %140 : f32 to vector<1x1xf32>
      %400 = arith.cmpf oge, %398, %399 : vector<1x1xf32>
      %401 = arith.select %400, %390, %386 : vector<1x1xi1>, vector<1x1xf32>
      %402 = arith.select %400, %387, %390 : vector<1x1xi1>, vector<1x1xf32>
      %c17_i32 = arith.constant 17 : i32
      %403 = arith.addf %401, %402 : vector<1x1xf32>
      %cst_109 = arith.constant 5.000000e-01 : f32
      %404 = vector.broadcast %cst_109 : f32 to vector<1x1xf32>
      %405 = arith.mulf %404, %403 : vector<1x1xf32>
      %406 = vector.broadcast %405 : vector<1x1xf32> to vector<8x128xf32>
      %407 = arith.cmpf ogt, %137, %406 : vector<8x128xf32>
      %408 = arith.extui %407 : vector<8x128xi1> to vector<8x128xi32>
      %409 = arith.sitofp %408 : vector<8x128xi32> to vector<8x128xf32>
      %cst_110 = arith.constant dense<0.000000e+00> : vector<8xf32>
      %410 = vector.multi_reduction <add>, %409, %cst_110 [1] : vector<8x128xf32> to vector<8xf32>
      %411 = vector.shape_cast %410 : vector<8xf32> to vector<8x1xf32>
      %cst_111 = arith.constant dense<0.000000e+00> : vector<1xf32>
      %412 = vector.multi_reduction <add>, %411, %cst_111 [0] : vector<8x1xf32> to vector<1xf32>
      %413 = vector.shape_cast %412 : vector<1xf32> to vector<1x1xf32>
      %414 = vector.broadcast %140 : f32 to vector<1x1xf32>
      %415 = arith.cmpf oge, %413, %414 : vector<1x1xf32>
      %416 = arith.select %415, %405, %401 : vector<1x1xi1>, vector<1x1xf32>
      %417 = arith.select %415, %402, %405 : vector<1x1xi1>, vector<1x1xf32>
      %c18_i32 = arith.constant 18 : i32
      %418 = arith.addf %416, %417 : vector<1x1xf32>
      %cst_112 = arith.constant 5.000000e-01 : f32
      %419 = vector.broadcast %cst_112 : f32 to vector<1x1xf32>
      %420 = arith.mulf %419, %418 : vector<1x1xf32>
      %421 = vector.broadcast %420 : vector<1x1xf32> to vector<8x128xf32>
      %422 = arith.cmpf ogt, %137, %421 : vector<8x128xf32>
      %423 = arith.extui %422 : vector<8x128xi1> to vector<8x128xi32>
      %424 = arith.sitofp %423 : vector<8x128xi32> to vector<8x128xf32>
      %cst_113 = arith.constant dense<0.000000e+00> : vector<8xf32>
      %425 = vector.multi_reduction <add>, %424, %cst_113 [1] : vector<8x128xf32> to vector<8xf32>
      %426 = vector.shape_cast %425 : vector<8xf32> to vector<8x1xf32>
      %cst_114 = arith.constant dense<0.000000e+00> : vector<1xf32>
      %427 = vector.multi_reduction <add>, %426, %cst_114 [0] : vector<8x1xf32> to vector<1xf32>
      %428 = vector.shape_cast %427 : vector<1xf32> to vector<1x1xf32>
      %429 = vector.broadcast %140 : f32 to vector<1x1xf32>
      %430 = arith.cmpf oge, %428, %429 : vector<1x1xf32>
      %431 = arith.select %430, %420, %416 : vector<1x1xi1>, vector<1x1xf32>
      %432 = arith.select %430, %417, %420 : vector<1x1xi1>, vector<1x1xf32>
      %c19_i32 = arith.constant 19 : i32
      %433 = arith.addf %431, %432 : vector<1x1xf32>
      %cst_115 = arith.constant 5.000000e-01 : f32
      %434 = vector.broadcast %cst_115 : f32 to vector<1x1xf32>
      %435 = arith.mulf %434, %433 : vector<1x1xf32>
      %436 = vector.broadcast %435 : vector<1x1xf32> to vector<8x128xf32>
      %437 = arith.cmpf ogt, %137, %436 : vector<8x128xf32>
      %438 = arith.extui %437 : vector<8x128xi1> to vector<8x128xi32>
      %439 = arith.sitofp %438 : vector<8x128xi32> to vector<8x128xf32>
      %cst_116 = arith.constant dense<0.000000e+00> : vector<8xf32>
      %440 = vector.multi_reduction <add>, %439, %cst_116 [1] : vector<8x128xf32> to vector<8xf32>
      %441 = vector.shape_cast %440 : vector<8xf32> to vector<8x1xf32>
      %cst_117 = arith.constant dense<0.000000e+00> : vector<1xf32>
      %442 = vector.multi_reduction <add>, %441, %cst_117 [0] : vector<8x1xf32> to vector<1xf32>
      %443 = vector.shape_cast %442 : vector<1xf32> to vector<1x1xf32>
      %444 = vector.broadcast %140 : f32 to vector<1x1xf32>
      %445 = arith.cmpf oge, %443, %444 : vector<1x1xf32>
      %446 = arith.select %445, %435, %431 : vector<1x1xi1>, vector<1x1xf32>
      %447 = arith.select %445, %432, %435 : vector<1x1xi1>, vector<1x1xf32>
      %c20_i32 = arith.constant 20 : i32
      %448 = arith.addf %446, %447 : vector<1x1xf32>
      %cst_118 = arith.constant 5.000000e-01 : f32
      %449 = vector.broadcast %cst_118 : f32 to vector<1x1xf32>
      %450 = arith.mulf %449, %448 : vector<1x1xf32>
      %451 = vector.broadcast %450 : vector<1x1xf32> to vector<8x128xf32>
      %452 = arith.cmpf ogt, %137, %451 : vector<8x128xf32>
      %453 = arith.extui %452 : vector<8x128xi1> to vector<8x128xi32>
      %454 = arith.sitofp %453 : vector<8x128xi32> to vector<8x128xf32>
      %cst_119 = arith.constant dense<0.000000e+00> : vector<8xf32>
      %455 = vector.multi_reduction <add>, %454, %cst_119 [1] : vector<8x128xf32> to vector<8xf32>
      %456 = vector.shape_cast %455 : vector<8xf32> to vector<8x1xf32>
      %cst_120 = arith.constant dense<0.000000e+00> : vector<1xf32>
      %457 = vector.multi_reduction <add>, %456, %cst_120 [0] : vector<8x1xf32> to vector<1xf32>
      %458 = vector.shape_cast %457 : vector<1xf32> to vector<1x1xf32>
      %459 = vector.broadcast %140 : f32 to vector<1x1xf32>
      %460 = arith.cmpf oge, %458, %459 : vector<1x1xf32>
      %461 = arith.select %460, %450, %446 : vector<1x1xi1>, vector<1x1xf32>
      %462 = arith.select %460, %447, %450 : vector<1x1xi1>, vector<1x1xf32>
      %c21_i32 = arith.constant 21 : i32
      %463 = arith.addf %461, %462 : vector<1x1xf32>
      %cst_121 = arith.constant 5.000000e-01 : f32
      %464 = vector.broadcast %cst_121 : f32 to vector<1x1xf32>
      %465 = arith.mulf %464, %463 : vector<1x1xf32>
      %466 = vector.broadcast %465 : vector<1x1xf32> to vector<8x128xf32>
      %467 = arith.cmpf ogt, %137, %466 : vector<8x128xf32>
      %468 = arith.extui %467 : vector<8x128xi1> to vector<8x128xi32>
      %469 = arith.sitofp %468 : vector<8x128xi32> to vector<8x128xf32>
      %cst_122 = arith.constant dense<0.000000e+00> : vector<8xf32>
      %470 = vector.multi_reduction <add>, %469, %cst_122 [1] : vector<8x128xf32> to vector<8xf32>
      %471 = vector.shape_cast %470 : vector<8xf32> to vector<8x1xf32>
      %cst_123 = arith.constant dense<0.000000e+00> : vector<1xf32>
      %472 = vector.multi_reduction <add>, %471, %cst_123 [0] : vector<8x1xf32> to vector<1xf32>
      %473 = vector.shape_cast %472 : vector<1xf32> to vector<1x1xf32>
      %474 = vector.broadcast %140 : f32 to vector<1x1xf32>
      %475 = arith.cmpf oge, %473, %474 : vector<1x1xf32>
      %476 = arith.select %475, %465, %461 : vector<1x1xi1>, vector<1x1xf32>
      %477 = arith.select %475, %462, %465 : vector<1x1xi1>, vector<1x1xf32>
      %c22_i32 = arith.constant 22 : i32
      %478 = arith.addf %476, %477 : vector<1x1xf32>
      %cst_124 = arith.constant 5.000000e-01 : f32
      %479 = vector.broadcast %cst_124 : f32 to vector<1x1xf32>
      %480 = arith.mulf %479, %478 : vector<1x1xf32>
      %481 = vector.broadcast %480 : vector<1x1xf32> to vector<8x128xf32>
      %482 = arith.cmpf ogt, %137, %481 : vector<8x128xf32>
      %483 = arith.extui %482 : vector<8x128xi1> to vector<8x128xi32>
      %484 = arith.sitofp %483 : vector<8x128xi32> to vector<8x128xf32>
      %cst_125 = arith.constant dense<0.000000e+00> : vector<8xf32>
      %485 = vector.multi_reduction <add>, %484, %cst_125 [1] : vector<8x128xf32> to vector<8xf32>
      %486 = vector.shape_cast %485 : vector<8xf32> to vector<8x1xf32>
      %cst_126 = arith.constant dense<0.000000e+00> : vector<1xf32>
      %487 = vector.multi_reduction <add>, %486, %cst_126 [0] : vector<8x1xf32> to vector<1xf32>
      %488 = vector.shape_cast %487 : vector<1xf32> to vector<1x1xf32>
      %489 = vector.broadcast %140 : f32 to vector<1x1xf32>
      %490 = arith.cmpf oge, %488, %489 : vector<1x1xf32>
      %491 = arith.select %490, %480, %476 : vector<1x1xi1>, vector<1x1xf32>
      %492 = arith.select %490, %477, %480 : vector<1x1xi1>, vector<1x1xf32>
      %c23_i32 = arith.constant 23 : i32
      %493 = arith.addf %491, %492 : vector<1x1xf32>
      %cst_127 = arith.constant 5.000000e-01 : f32
      %494 = vector.broadcast %cst_127 : f32 to vector<1x1xf32>
      %495 = arith.mulf %494, %493 : vector<1x1xf32>
      %496 = vector.broadcast %495 : vector<1x1xf32> to vector<8x128xf32>
      %497 = arith.cmpf ogt, %137, %496 : vector<8x128xf32>
      %498 = arith.extui %497 : vector<8x128xi1> to vector<8x128xi32>
      %499 = arith.sitofp %498 : vector<8x128xi32> to vector<8x128xf32>
      %cst_128 = arith.constant dense<0.000000e+00> : vector<8xf32>
      %500 = vector.multi_reduction <add>, %499, %cst_128 [1] : vector<8x128xf32> to vector<8xf32>
      %501 = vector.shape_cast %500 : vector<8xf32> to vector<8x1xf32>
      %cst_129 = arith.constant dense<0.000000e+00> : vector<1xf32>
      %502 = vector.multi_reduction <add>, %501, %cst_129 [0] : vector<8x1xf32> to vector<1xf32>
      %503 = vector.shape_cast %502 : vector<1xf32> to vector<1x1xf32>
      %504 = vector.broadcast %140 : f32 to vector<1x1xf32>
      %505 = arith.cmpf oge, %503, %504 : vector<1x1xf32>
      %506 = arith.select %505, %495, %491 : vector<1x1xi1>, vector<1x1xf32>
      %507 = arith.select %505, %492, %495 : vector<1x1xi1>, vector<1x1xf32>
      %c24_i32 = arith.constant 24 : i32
      %508 = arith.addf %506, %507 : vector<1x1xf32>
      %cst_130 = arith.constant 5.000000e-01 : f32
      %509 = vector.broadcast %cst_130 : f32 to vector<1x1xf32>
      %510 = arith.mulf %509, %508 : vector<1x1xf32>
      %511 = vector.broadcast %510 : vector<1x1xf32> to vector<8x128xf32>
      %512 = arith.cmpf ogt, %137, %511 : vector<8x128xf32>
      %513 = arith.extui %512 : vector<8x128xi1> to vector<8x128xi32>
      %514 = arith.sitofp %513 : vector<8x128xi32> to vector<8x128xf32>
      %cst_131 = arith.constant dense<0.000000e+00> : vector<8xf32>
      %515 = vector.multi_reduction <add>, %514, %cst_131 [1] : vector<8x128xf32> to vector<8xf32>
      %516 = vector.shape_cast %515 : vector<8xf32> to vector<8x1xf32>
      %cst_132 = arith.constant dense<0.000000e+00> : vector<1xf32>
      %517 = vector.multi_reduction <add>, %516, %cst_132 [0] : vector<8x1xf32> to vector<1xf32>
      %518 = vector.shape_cast %517 : vector<1xf32> to vector<1x1xf32>
      %519 = vector.broadcast %140 : f32 to vector<1x1xf32>
      %520 = arith.cmpf oge, %518, %519 : vector<1x1xf32>
      %521 = arith.select %520, %510, %506 : vector<1x1xi1>, vector<1x1xf32>
      %522 = arith.select %520, %507, %510 : vector<1x1xi1>, vector<1x1xf32>
      %c25_i32 = arith.constant 25 : i32
      %523 = arith.addf %521, %522 : vector<1x1xf32>
      %cst_133 = arith.constant 5.000000e-01 : f32
      %524 = vector.broadcast %cst_133 : f32 to vector<1x1xf32>
      %525 = arith.mulf %524, %523 : vector<1x1xf32>
      %526 = vector.broadcast %525 : vector<1x1xf32> to vector<8x128xf32>
      %527 = arith.cmpf ogt, %137, %526 : vector<8x128xf32>
      %528 = arith.extui %527 : vector<8x128xi1> to vector<8x128xi32>
      %529 = arith.sitofp %528 : vector<8x128xi32> to vector<8x128xf32>
      %cst_134 = arith.constant dense<0.000000e+00> : vector<8xf32>
      %530 = vector.multi_reduction <add>, %529, %cst_134 [1] : vector<8x128xf32> to vector<8xf32>
      %531 = vector.shape_cast %530 : vector<8xf32> to vector<8x1xf32>
      %cst_135 = arith.constant dense<0.000000e+00> : vector<1xf32>
      %532 = vector.multi_reduction <add>, %531, %cst_135 [0] : vector<8x1xf32> to vector<1xf32>
      %533 = vector.shape_cast %532 : vector<1xf32> to vector<1x1xf32>
      %534 = vector.broadcast %140 : f32 to vector<1x1xf32>
      %535 = arith.cmpf oge, %533, %534 : vector<1x1xf32>
      %536 = arith.select %535, %525, %521 : vector<1x1xi1>, vector<1x1xf32>
      %537 = arith.select %535, %522, %525 : vector<1x1xi1>, vector<1x1xf32>
      %c26_i32 = arith.constant 26 : i32
      %538 = arith.addf %536, %537 : vector<1x1xf32>
      %cst_136 = arith.constant 5.000000e-01 : f32
      %539 = vector.broadcast %cst_136 : f32 to vector<1x1xf32>
      %540 = arith.mulf %539, %538 : vector<1x1xf32>
      %541 = vector.broadcast %540 : vector<1x1xf32> to vector<8x128xf32>
      %542 = arith.cmpf ogt, %137, %541 : vector<8x128xf32>
      %543 = arith.extui %542 : vector<8x128xi1> to vector<8x128xi32>
      %544 = arith.sitofp %543 : vector<8x128xi32> to vector<8x128xf32>
      %cst_137 = arith.constant dense<0.000000e+00> : vector<8xf32>
      %545 = vector.multi_reduction <add>, %544, %cst_137 [1] : vector<8x128xf32> to vector<8xf32>
      %546 = vector.shape_cast %545 : vector<8xf32> to vector<8x1xf32>
      %cst_138 = arith.constant dense<0.000000e+00> : vector<1xf32>
      %547 = vector.multi_reduction <add>, %546, %cst_138 [0] : vector<8x1xf32> to vector<1xf32>
      %548 = vector.shape_cast %547 : vector<1xf32> to vector<1x1xf32>
      %549 = vector.broadcast %140 : f32 to vector<1x1xf32>
      %550 = arith.cmpf oge, %548, %549 : vector<1x1xf32>
      %551 = arith.select %550, %540, %536 : vector<1x1xi1>, vector<1x1xf32>
      %552 = arith.select %550, %537, %540 : vector<1x1xi1>, vector<1x1xf32>
      %c27_i32 = arith.constant 27 : i32
      %553 = arith.addf %551, %552 : vector<1x1xf32>
      %cst_139 = arith.constant 5.000000e-01 : f32
      %554 = vector.broadcast %cst_139 : f32 to vector<1x1xf32>
      %555 = arith.mulf %554, %553 : vector<1x1xf32>
      %556 = vector.broadcast %555 : vector<1x1xf32> to vector<8x128xf32>
      %557 = arith.cmpf ogt, %137, %556 : vector<8x128xf32>
      %558 = arith.extui %557 : vector<8x128xi1> to vector<8x128xi32>
      %559 = arith.sitofp %558 : vector<8x128xi32> to vector<8x128xf32>
      %cst_140 = arith.constant dense<0.000000e+00> : vector<8xf32>
      %560 = vector.multi_reduction <add>, %559, %cst_140 [1] : vector<8x128xf32> to vector<8xf32>
      %561 = vector.shape_cast %560 : vector<8xf32> to vector<8x1xf32>
      %cst_141 = arith.constant dense<0.000000e+00> : vector<1xf32>
      %562 = vector.multi_reduction <add>, %561, %cst_141 [0] : vector<8x1xf32> to vector<1xf32>
      %563 = vector.shape_cast %562 : vector<1xf32> to vector<1x1xf32>
      %564 = vector.broadcast %140 : f32 to vector<1x1xf32>
      %565 = arith.cmpf oge, %563, %564 : vector<1x1xf32>
      %566 = arith.select %565, %555, %551 : vector<1x1xi1>, vector<1x1xf32>
      %567 = arith.select %565, %552, %555 : vector<1x1xi1>, vector<1x1xf32>
      %c28_i32 = arith.constant 28 : i32
      %568 = arith.addf %566, %567 : vector<1x1xf32>
      %cst_142 = arith.constant 5.000000e-01 : f32
      %569 = vector.broadcast %cst_142 : f32 to vector<1x1xf32>
      %570 = arith.mulf %569, %568 : vector<1x1xf32>
      %571 = vector.broadcast %570 : vector<1x1xf32> to vector<8x128xf32>
      %572 = arith.cmpf ogt, %137, %571 : vector<8x128xf32>
      %573 = arith.extui %572 : vector<8x128xi1> to vector<8x128xi32>
      %574 = arith.sitofp %573 : vector<8x128xi32> to vector<8x128xf32>
      %cst_143 = arith.constant dense<0.000000e+00> : vector<8xf32>
      %575 = vector.multi_reduction <add>, %574, %cst_143 [1] : vector<8x128xf32> to vector<8xf32>
      %576 = vector.shape_cast %575 : vector<8xf32> to vector<8x1xf32>
      %cst_144 = arith.constant dense<0.000000e+00> : vector<1xf32>
      %577 = vector.multi_reduction <add>, %576, %cst_144 [0] : vector<8x1xf32> to vector<1xf32>
      %578 = vector.shape_cast %577 : vector<1xf32> to vector<1x1xf32>
      %579 = vector.broadcast %140 : f32 to vector<1x1xf32>
      %580 = arith.cmpf oge, %578, %579 : vector<1x1xf32>
      %581 = arith.select %580, %570, %566 : vector<1x1xi1>, vector<1x1xf32>
      %582 = arith.select %580, %567, %570 : vector<1x1xi1>, vector<1x1xf32>
      %c29_i32 = arith.constant 29 : i32
      %583 = arith.addf %581, %582 : vector<1x1xf32>
      %cst_145 = arith.constant 5.000000e-01 : f32
      %584 = vector.broadcast %cst_145 : f32 to vector<1x1xf32>
      %585 = arith.mulf %584, %583 : vector<1x1xf32>
      %586 = vector.broadcast %585 : vector<1x1xf32> to vector<8x128xf32>
      %587 = arith.cmpf ogt, %137, %586 : vector<8x128xf32>
      %588 = arith.extui %587 : vector<8x128xi1> to vector<8x128xi32>
      %589 = arith.sitofp %588 : vector<8x128xi32> to vector<8x128xf32>
      %cst_146 = arith.constant dense<0.000000e+00> : vector<8xf32>
      %590 = vector.multi_reduction <add>, %589, %cst_146 [1] : vector<8x128xf32> to vector<8xf32>
      %591 = vector.shape_cast %590 : vector<8xf32> to vector<8x1xf32>
      %cst_147 = arith.constant dense<0.000000e+00> : vector<1xf32>
      %592 = vector.multi_reduction <add>, %591, %cst_147 [0] : vector<8x1xf32> to vector<1xf32>
      %593 = vector.shape_cast %592 : vector<1xf32> to vector<1x1xf32>
      %594 = vector.broadcast %140 : f32 to vector<1x1xf32>
      %595 = arith.cmpf oge, %593, %594 : vector<1x1xf32>
      %596 = arith.select %595, %585, %581 : vector<1x1xi1>, vector<1x1xf32>
      %597 = arith.select %595, %582, %585 : vector<1x1xi1>, vector<1x1xf32>
      %598 = vector.broadcast %597 : vector<1x1xf32> to vector<8x128xf32>
      %599 = arith.cmpf ogt, %137, %598 : vector<8x128xf32>
      %600 = arith.extui %599 : vector<8x128xi1> to vector<8x128xi32>
      %601 = arith.sitofp %600 : vector<8x128xi32> to vector<8x128xf32>
      %cst_148 = arith.constant dense<0.000000e+00> : vector<8xf32>
      %602 = vector.multi_reduction <add>, %601, %cst_148 [1] : vector<8x128xf32> to vector<8xf32>
      %603 = vector.shape_cast %602 : vector<8xf32> to vector<8x1xf32>
      %cst_149 = arith.constant dense<0.000000e+00> : vector<1xf32>
      %604 = vector.multi_reduction <add>, %603, %cst_149 [0] : vector<8x1xf32> to vector<1xf32>
      %605 = vector.shape_cast %604 : vector<1xf32> to vector<1x1xf32>
      %606 = vector.broadcast %597 : vector<1x1xf32> to vector<8x128xf32>
      %607 = arith.cmpf ogt, %137, %606 : vector<8x128xf32>
      %cst_150 = arith.constant 0.000000e+00 : f32
      %608 = vector.broadcast %cst_150 : f32 to vector<8x128xf32>
      %609 = arith.select %607, %137, %608 : vector<8x128xi1>, vector<8x128xf32>
      %cst_151 = arith.constant dense<0.000000e+00> : vector<8xf32>
      %610 = vector.multi_reduction <add>, %609, %cst_151 [1] : vector<8x128xf32> to vector<8xf32>
      %611 = vector.shape_cast %610 : vector<8xf32> to vector<8x1xf32>
      %cst_152 = arith.constant dense<0.000000e+00> : vector<1xf32>
      %612 = vector.multi_reduction <add>, %611, %cst_152 [0] : vector<8x1xf32> to vector<1xf32>
      %613 = vector.shape_cast %612 : vector<1xf32> to vector<1x1xf32>
      %614 = vector.broadcast %140 : f32 to vector<1x1xf32>
      %615 = arith.subf %614, %605 : vector<1x1xf32>
      %cst_153 = arith.constant 0.000000e+00 : f32
      %616 = vector.broadcast %cst_153 : f32 to vector<1x1xf32>
      %617 = arith.maximumf %597, %616 : vector<1x1xf32>
      %618 = arith.mulf %615, %617 : vector<1x1xf32>
      %619 = arith.addf %613, %618 : vector<1x1xf32>
      %620 = tpu.iota {dimensions = array<i32: 1>} : vector<1x128xi32>
      %c0_i32_154 = arith.constant 0 : i32
      %621 = vector.broadcast %c0_i32_154 : i32 to vector<1x128xi32>
      %622 = arith.cmpi eq, %620, %621 : vector<1x128xi32>
      %c0_155 = arith.constant 0 : index
      %623 = memref.load %arg7[%c0_155] : memref<3xf32, #tpu.memory_space<smem>>
      %cst_156 = arith.constant 0.000000e+00 : f32
      %624 = vector.broadcast %623 : f32 to vector<1x128xf32>
      %625 = vector.broadcast %cst_156 : f32 to vector<1x128xf32>
      %626 = arith.select %622, %624, %625 : vector<1x128xi1>, vector<1x128xf32>
      %c1_i32_157 = arith.constant 1 : i32
      %627 = vector.broadcast %c1_i32_157 : i32 to vector<1x128xi32>
      %628 = arith.cmpi eq, %620, %627 : vector<1x128xi32>
      %c1_158 = arith.constant 1 : index
      %629 = memref.load %arg7[%c1_158] : memref<3xf32, #tpu.memory_space<smem>>
      %630 = vector.broadcast %629 : f32 to vector<1x1xf32>
      %631 = arith.addf %630, %619 : vector<1x1xf32>
      %cst_159 = arith.constant 0.000000e+00 : f32
      %632 = vector.shape_cast %631 : vector<1x1xf32> to vector<1x1xf32>
      %633 = vector.broadcast %632 : vector<1x1xf32> to vector<1x128xf32>
      %634 = vector.broadcast %cst_159 : f32 to vector<1x128xf32>
      %635 = arith.select %628, %633, %634 : vector<1x128xi1>, vector<1x128xf32>
      %636 = arith.addf %626, %635 : vector<1x128xf32>
      %c2_i32_160 = arith.constant 2 : i32
      %637 = vector.broadcast %c2_i32_160 : i32 to vector<1x128xi32>
      %638 = arith.cmpi eq, %620, %637 : vector<1x128xi32>
      %c2_161 = arith.constant 2 : index
      %639 = memref.load %arg7[%c2_161] : memref<3xf32, #tpu.memory_space<smem>>
      %cst_162 = arith.constant 0.000000e+00 : f32
      %640 = vector.broadcast %639 : f32 to vector<1x128xf32>
      %641 = vector.broadcast %cst_162 : f32 to vector<1x128xf32>
      %642 = arith.select %638, %640, %641 : vector<1x128xi1>, vector<1x128xf32>
      %643 = arith.addf %636, %642 : vector<1x128xf32>
      %c0_163 = arith.constant 0 : index
      %c0_164 = arith.constant 0 : index
      %c0_165 = arith.constant 0 : index
      %644 = vector.load %arg5[%c0_163, %c0_164, %c0_165] : memref<1x1x128xf32, #tpu.memory_space<vmem>>, vector<1x1x128xf32>
      %645 = vector.shape_cast %644 : vector<1x1x128xf32> to vector<1x128xf32>
      %646 = vector.shape_cast %643 : vector<1x128xf32> to vector<1x1x128xf32>
      tpu.vector_store %arg5[%c0_163, %c0_164, %c0_165], %646 {strides = array<i32>} : memref<1x1x128xf32, #tpu.memory_space<vmem>>, vector<1x1x128xf32>,
    } else {
    }
    return
  }
  func.func @transform_0(%arg0: i32, %arg1: i32) -> (i32, i32, i32, i32) {
    %c0_i32 = arith.constant 0 : i32
    %c0_i32_0 = arith.constant 0 : i32
    %c0_i32_1 = arith.constant 0 : i32
    return %arg0, %c0_i32, %c0_i32_0, %arg1 : i32, i32, i32, i32
  }
  func.func @transform_1(%arg0: i32, %arg1: i32) -> (i32, i32, i32, i32) {
    %c0_i32 = arith.constant 0 : i32
    %c0_i32_0 = arith.constant 0 : i32
    %c0_i32_1 = arith.constant 0 : i32
    return %arg0, %c0_i32, %c0_i32_0, %arg1 : i32, i32, i32, i32
  }
  func.func @transform_2(%arg0: i32, %arg1: i32) -> (i32, i32, i32) {
    %c0_i32 = arith.constant 0 : i32
    %c0_i32_0 = arith.constant 0 : i32
    return %arg0, %c0_i32, %arg1 : i32, i32, i32
  }
  func.func @transform_3(%arg0: i32, %arg1: i32) -> (i32, i32, i32) {
    %c0_i32 = arith.constant 0 : i32
    %c0_i32_0 = arith.constant 0 : i32
    %c0_i32_1 = arith.constant 0 : i32
    return %arg0, %c0_i32, %c0_i32_0 : i32, i32, i32
  }
}

</mosaic_0001>

<llo_original>
// kernel: multibox_loss_forward.1
$region0: #{multibox_loss_forward.1}
  #allocation0 [shape = 'u32[]', space=smem, size = 0x4, offset = 0x4, fixed_abs, tag = 'smem constant byte address 0x4 - core index']
  #allocation1 [shape = 'u32[72,128]{1,0:T(1,128)}', space=vmem, size = 0x9000, scoped, tag = 'internal scratch']
  #allocation2 [shape = 'f32[8,128]{1,0:T(8,128)}', space=vmem, size = 0x1000, scoped, tag = 'scratch operand']
  #allocation3 [shape = 'f32[3]{0:T(128)}', space=smem, size = 0x200, scoped, tag = 'scratch operand']
  %s0 = inlined_call_operand.vmem [shape: f32[2,8,8,128], index: 0, kind: input, shape index: {}]
  %s1 = inlined_call_operand.vmem [shape: f32[2,8,8,128], index: 1, kind: input, shape index: {}]
  %s2 = inlined_call_operand.vmem [shape: s32[2,8,128], index: 2, kind: input, shape index: {}]
  %s3 = inlined_call_operand.vmem [shape: f32[2,1,128], index: 3, kind: output, shape index: {}]
  %s4 = sld [smem:[#allocation0]]
  $region53: #{multibox_loss_forward.1} parent=0
    _
  %s6 = ssub.s32 1, %s4
  %s7 = scalar_select 0, %s6, %s4
  loop: start=0, step=1, limit=4
  $region2: #{multibox_loss_forward.1} parent=0 // loop_pre_header
    _
  $region3: #{multibox_loss_forward.1} parent=0 // loop_header
    %s9 = sphi 0, %s13
    %p10 = scmp.ge.s32.totalorder %s9, 4
    %s16 = sphi 0, %s28
    %s17 = sphi 0, %s24
    %s18 = sphi 0, %s16
    %s19 = sphi 0, %s17
    %s20 = sphi 0, %s18
    %s21 = sphi 0, %s19
    %s33 = sphi 0, %s35
    %s36 = sphi 0, %s33
    %s37 = sphi 0, %s36
    %s53 = sphi 0, %s37
    %s61 = sphi 0, %s63
    %s64 = sphi 0, %s61
    %s65 = sphi 0, %s64
    %s81 = sphi 0, %s65
    %s89 = sphi 0, %s91
    %s92 = sphi 0, %s89
    %s93 = sphi 0, %s92
    %s109 = sphi 0, %s93
    %s115 = sphi 0, %s117
    %s118 = sphi 0, %s115
    %s119 = sphi 0, %s118
    %s135 = sphi 0, %s119
  $region4: #{multibox_loss_forward.1} parent=0 // loop_header_branch
    %12 = sbr.rel (%p10) target = $region8
  $region5: #{multibox_loss_forward.1} parent=0 // loop_body
    %s14 = ssub.s32 %s9, 1
    %s15 = ssub.s32 %s9, 2
    %s22 = sadd.s32 1, %s17
    %p23 = scmp.ge.s32.totalorder %s22, 1
    %s24 = scalar_select %p23, 0, %s22
    %s25 = sadd.s32 1, %s16
    %s26 = scalar_select %p23, %s25, %s16
    %p27 = scmp.ge.s32.totalorder %s26, 2
    %s28 = scalar_select %p27, 0, %s26
    %s29 = ssub.s32 %s16, %s28
    %s30 = ssub.s32 %s17, %s24
    %s31 = sor.u32 %s29, %s30
    %p32 = scmp.eq.s32.totalorder %s31, 0
    %s34 = sadd.s32 %s33, 1
    %s35 = scalar_select %p32, %s33, %s34
    %p38 = pneg %p32
    %p39 = scmp.eq.s32.totalorder %s9, 1
    %p40 = por %p38, %p39
    %p41 = scmp.ne.s32.totalorder %s33, %s36
    %p42 = scmp.eq.s32.totalorder %s9, 0
    %p43 = por %p41, %p42
    %p44 = scmp.ne.s32.totalorder %s33, %s36
    %p45 = scmp.eq.s32.totalorder %s14, 1
    %p46 = por %p44, %p45
    %p47 = scmp.ne.s32.totalorder %s36, %s37
    %p48 = scmp.eq.s32.totalorder %s14, 0
    %p49 = por %p47, %p48
    %p50 = scmp.ne.s32.totalorder %s36, %s37
    %p51 = scmp.eq.s32.totalorder %s15, 1
    %p52 = por %p50, %p51
    %p54 = scmp.ne.s32.totalorder %s37, %s53
    %p55 = scmp.eq.s32.totalorder %s15, 0
    %p56 = por %p54, %p55
    %s57 = ssub.s32 %s16, %s28
    %s58 = ssub.s32 %s17, %s24
    %s59 = sor.u32 %s57, %s58
    %p60 = scmp.eq.s32.totalorder %s59, 0
    %s62 = sadd.s32 %s61, 1
    %s63 = scalar_select %p60, %s61, %s62
    %p66 = pneg %p60
    %p67 = scmp.eq.s32.totalorder %s9, 1
    %p68 = por %p66, %p67
    %p69 = scmp.ne.s32.totalorder %s61, %s64
    %p70 = scmp.eq.s32.totalorder %s9, 0
    %p71 = por %p69, %p70
    %p72 = scmp.ne.s32.totalorder %s61, %s64
    %p73 = scmp.eq.s32.totalorder %s14, 1
    %p74 = por %p72, %p73
    %p75 = scmp.ne.s32.totalorder %s64, %s65
    %p76 = scmp.eq.s32.totalorder %s14, 0
    %p77 = por %p75, %p76
    %p78 = scmp.ne.s32.totalorder %s64, %s65
    %p79 = scmp.eq.s32.totalorder %s15, 1
    %p80 = por %p78, %p79
    %p82 = scmp.ne.s32.totalorder %s65, %s81
    %p83 = scmp.eq.s32.totalorder %s15, 0
    %p84 = por %p82, %p83
    %s85 = ssub.s32 %s16, %s28
    %s86 = ssub.s32 %s17, %s24
    %s87 = sor.u32 %s85, %s86
    %p88 = scmp.eq.s32.totalorder %s87, 0
    %s90 = sadd.s32 %s89, 1
    %s91 = scalar_select %p88, %s89, %s90
    %p94 = pneg %p88
    %p95 = scmp.eq.s32.totalorder %s9, 1
    %p96 = por %p94, %p95
    %p97 = scmp.ne.s32.totalorder %s89, %s92
    %p98 = scmp.eq.s32.totalorder %s9, 0
    %p99 = por %p97, %p98
    %p100 = scmp.ne.s32.totalorder %s89, %s92
    %p101 = scmp.eq.s32.totalorder %s14, 1
    %p102 = por %p100, %p101
    %p103 = scmp.ne.s32.totalorder %s92, %s93
    %p104 = scmp.eq.s32.totalorder %s14, 0
    %p105 = por %p103, %p104
    %p106 = scmp.ne.s32.totalorder %s92, %s93
    %p107 = scmp.eq.s32.totalorder %s15, 1
    %p108 = por %p106, %p107
    %p110 = scmp.ne.s32.totalorder %s93, %s109
    %p111 = scmp.eq.s32.totalorder %s15, 0
    %p112 = por %p110, %p111
    %s113 = ssub.s32 %s16, %s28
    %p114 = scmp.eq.s32.totalorder %s113, 0
    %s116 = sadd.s32 %s115, 1
    %s117 = scalar_select %p114, %s115, %s116
    %p120 = pneg %p114
    %p121 = scmp.eq.s32.totalorder %s9, 1
    %p122 = por %p120, %p121
    %p123 = scmp.ne.s32.totalorder %s115, %s118
    %p124 = scmp.eq.s32.totalorder %s9, 0
    %p125 = por %p123, %p124
    %p126 = scmp.ne.s32.totalorder %s115, %s118
    %p127 = scmp.eq.s32.totalorder %s14, 1
    %p128 = por %p126, %p127
    %p129 = scmp.ne.s32.totalorder %s118, %s119
    %p130 = scmp.eq.s32.totalorder %s14, 0
    %p131 = por %p129, %p130
    %p132 = scmp.ne.s32.totalorder %s118, %s119
    %p133 = scmp.eq.s32.totalorder %s15, 1
    %p134 = por %p132, %p133
    %p136 = scmp.ne.s32.totalorder %s119, %s135
    %p137 = scmp.eq.s32.totalorder %s15, 0
    %p138 = por %p136, %p137
    %p139 = scmp.le.s32.totalorder 1, %s9
    %p140 = scmp.lt.s32.totalorder %s9, 3
    %p141 = pnand %p139, %p140
    %p142 = pneg %p141
    // Predicated region
    $region9: #{multibox_loss_forward.1} parent=5 // pred_check
      _
    $region10: #{multibox_loss_forward.1} parent=5 // pred_check_branch
      %144 = sbr.rel (%p141) target = $region12
    $region11: #{multibox_loss_forward.1} parent=5 // pred_region
      %s145 = ssub.s32 %s9, 1
    $region12: #{multibox_loss_forward.1} parent=5 // pred_fallthru
      _
    %p146 = scmp.lt.s32.totalorder %s9, 2
    // Predicated region
    $region13: #{multibox_loss_forward.1} parent=5 // pred_check
      %p147 = pneg %p146
    $region14: #{multibox_loss_forward.1} parent=5 // pred_check_branch
      %149 = sbr.rel (%p147) target = $region16
    $region15: #{multibox_loss_forward.1} parent=5 // pred_region
      // Predicated region
      $region17: #{multibox_loss_forward.1} parent=15 // pred_check
        %p150 = pneg %p43
      $region18: #{multibox_loss_forward.1} parent=15 // pred_check_branch
        %152 = sbr.rel (%p150) target = $region20
      $region19: #{multibox_loss_forward.1} parent=15 // pred_region
        %p153 = scmp.lt.s32.totalorder %s16, 1
        %s154 = scalar_select %p153, %s16, 1
        %p155 = scmp.lt.s32.totalorder %s17, 0
        %s156 = scalar_select %p155, %s17, 0
        %s157 = smul.addr %s154, 8
        %s158 = sadd.s32 %s156, %s157
        %s159 = smul.addr %s158, 8
        %s160 = scalar_lea.vmem %s0, %s159
      $region20: #{multibox_loss_forward.1} parent=15 // pred_fallthru
        _
      // Predicated region
      $region21: #{multibox_loss_forward.1} parent=15 // pred_check
        %p161 = pneg %p71
      $region22: #{multibox_loss_forward.1} parent=15 // pred_check_branch
        %163 = sbr.rel (%p161) target = $region24
      $region23: #{multibox_loss_forward.1} parent=15 // pred_region
        %p164 = scmp.lt.s32.totalorder %s16, 1
        %s165 = scalar_select %p164, %s16, 1
        %p166 = scmp.lt.s32.totalorder %s17, 0
        %s167 = scalar_select %p166, %s17, 0
        %s168 = smul.addr %s165, 8
        %s169 = sadd.s32 %s167, %s168
        %s170 = smul.addr %s169, 8
        %s171 = scalar_lea.vmem %s1, %s170
      $region24: #{multibox_loss_forward.1} parent=15 // pred_fallthru
        _
      // Predicated region
      $region25: #{multibox_loss_forward.1} parent=15 // pred_check
        %p172 = pneg %p99
      $region26: #{multibox_loss_forward.1} parent=15 // pred_check_branch
        %174 = sbr.rel (%p172) target = $region28
      $region27: #{multibox_loss_forward.1} parent=15 // pred_region
        %p175 = scmp.lt.s32.totalorder %s16, 1
        %s176 = scalar_select %p175, %s16, 1
        %p177 = scmp.lt.s32.totalorder %s17, 0
        %s178 = scalar_select %p177, %s17, 0
        %s179 = sadd.s32 %s178, %s176
        %s180 = smul.addr %s179, 8
        %s181 = scalar_lea.vmem %s2, %s180
      $region28: #{multibox_loss_forward.1} parent=15 // pred_fallthru
        _
    $region16: #{multibox_loss_forward.1} parent=5 // pred_fallthru
      _
    %p182 = scmp.le.s32.totalorder 1, %s9
    %p183 = scmp.lt.s32.totalorder %s9, 3
    %p184 = pnand %p182, %p183
    %p185 = pneg %p184
    // Predicated region
    $region29: #{multibox_loss_forward.1} parent=5 // pred_check
      _
    $region30: #{multibox_loss_forward.1} parent=5 // pred_check_branch
      %187 = sbr.rel (%p184) target = $region32
    $region31: #{multibox_loss_forward.1} parent=5 // pred_region
      %s188 = ssub.s32 %s9, 1
      %p189 = scmp.lt.s32.totalorder %s18, 1
      %s190 = scalar_select %p189, %s18, 1
      %p191 = scmp.lt.s32.totalorder %s19, 0
      %s192 = scalar_select %p191, %s19, 0
      %s193 = smul.addr %s190, 8
      %s194 = sadd.s32 %s192, %s193
      %s195 = smul.addr %s194, 8
      %s196 = scalar_lea.vmem %s0, %s195
      %p197 = pneg %p49
      %p198 = pneg %p46
      %p199 = scmp.lt.s32.totalorder %s18, 1
      %s200 = scalar_select %p199, %s18, 1
      %p201 = scmp.lt.s32.totalorder %s19, 0
      %s202 = scalar_select %p201, %s19, 0
      %s203 = smul.addr %s200, 8
      %s204 = sadd.s32 %s202, %s203
      %s205 = smul.addr %s204, 8
      %s206 = scalar_lea.vmem %s1, %s205
      %p207 = pneg %p77
      %p208 = pneg %p74
      %p209 = scmp.lt.s32.totalorder %s18, 1
      %s210 = scalar_select %p209, %s18, 1
      %p211 = scmp.lt.s32.totalorder %s19, 0
      %s212 = scalar_select %p211, %s19, 0
      %s213 = sadd.s32 %s212, %s210
      %s214 = smul.addr %s213, 8
      %s215 = scalar_lea.vmem %s2, %s214
      %p216 = pneg %p105
      %p217 = pneg %p102
      %p218 = pneg %p131
      %p219 = pneg %p128
      %p220 = scmp.lt.s32.totalorder %s18, 1
      %s221 = scalar_select %p220, %s18, 1
      %s222 = scalar_lea.vmem %s3, %s221
      %p223 = scmp.lt.s32.totalorder %s18, 1
      %s224 = scalar_select %p223, %s18, 1
      %p225 = scmp.lt.s32.totalorder %s19, 0
      %s226 = scalar_select %p225, %s19, 0
      %s227 = smul.addr %s224, 8
      %s228 = sadd.s32 %s226, %s227
      %s229 = smul.addr %s228, 8
      %s230 = scalar_lea.vmem %s0, %s229
      %p231 = scmp.lt.s32.totalorder %s18, 1
      %s232 = scalar_select %p231, %s18, 1
      %p233 = scmp.lt.s32.totalorder %s19, 0
      %s234 = scalar_select %p233, %s19, 0
      %s235 = smul.addr %s232, 8
      %s236 = sadd.s32 %s234, %s235
      %s237 = smul.addr %s236, 8
      %s238 = scalar_lea.vmem %s1, %s237
      %p239 = scmp.lt.s32.totalorder %s18, 1
      %s240 = scalar_select %p239, %s18, 1
      %p241 = scmp.lt.s32.totalorder %s19, 0
      %s242 = scalar_select %p241, %s19, 0
      %s243 = sadd.s32 %s242, %s240
      %s244 = smul.addr %s243, 8
      %s245 = scalar_lea.vmem %s2, %s244
      %p246 = scmp.lt.s32.totalorder %s18, 1
      %s247 = scalar_select %p246, %s18, 1
      %s248 = scalar_lea.vmem %s3, %s247
      %p249 = scmp.eq.s32.totalorder %s19, 0
      // Predicated region
      $region33: #{multibox_loss_forward.1} parent=31 // pred_check
        %p250 = pneg %p249
      $region34: #{multibox_loss_forward.1} parent=31 // pred_check_branch
        %252 = sbr.rel (%p250) target = $region36
      $region35: #{multibox_loss_forward.1} parent=31 // pred_region
        %s253 = scalar_lea.smem [#allocation3], 0
        %254 = sst [smem:[%s253]] 0.0
        %s255 = scalar_lea.smem [#allocation3], 1
        %256 = sst [smem:[%s255]] 0.0
        %s257 = scalar_lea.smem [#allocation3], 2
        %258 = sst [smem:[%s257]] 0.0
      $region36: #{multibox_loss_forward.1} parent=31 // pred_fallthru
        _
      %v259 = vld [vmem:[%s230] sm:$0xff]
      %v260 = vld [vmem:[%s230 + $0x8] sm:$0xff]
      %v261 = vld [vmem:[%s230 + $0x10] sm:$0xff]
      %v262 = vld [vmem:[%s230 + $0x18] sm:$0xff]
      %v263 = vld [vmem:[%s230 + $0x20] sm:$0xff]
      %v264 = vld [vmem:[%s230 + $0x28] sm:$0xff]
      %v265 = vld [vmem:[%s230 + $0x30] sm:$0xff]
      %v266 = vld [vmem:[%s230 + $0x38] sm:$0xff]
      %v267 = vld [vmem:[%s245] sm:$0xff]
      %vm268 = vcmp.gt.s32.totalorder %v267, 0
      %v269 = vsel %vm268, 1, 0
      %v270 = vcvt.s32.f32 %v269
      %v271 = vld [vmem:[%s238] sm:$0xff]
      %v272 = vld [vmem:[%s238 + $0x8] sm:$0xff]
      %v273 = vld [vmem:[%s238 + $0x10] sm:$0xff]
      %v274 = vld [vmem:[%s238 + $0x18] sm:$0xff]
      %v275 = vld [vmem:[%s238 + $0x20] sm:$0xff]
      %v276 = vld [vmem:[%s238 + $0x28] sm:$0xff]
      %v277 = vld [vmem:[%s238 + $0x30] sm:$0xff]
      %v278 = vld [vmem:[%s238 + $0x38] sm:$0xff]
      %v279 = vsub.f32 %v271, %v275
      %v280 = vsub.f32 %v272, %v276
      %v281 = vsub.f32 %v273, %v277
      %v282 = vsub.f32 %v274, %v278
      %v283 = vand.u32 2147483647, %v279
      %v284 = vand.u32 2147483647, %v280
      %v285 = vand.u32 2147483647, %v281
      %v286 = vand.u32 2147483647, %v282
      %vm287 = vcmp.lt.f32.partialorder %v283, 1.0
      %vm288 = vcmp.lt.f32.partialorder %v284, 1.0
      %vm289 = vcmp.lt.f32.partialorder %v285, 1.0
      %vm290 = vcmp.lt.f32.partialorder %v286, 1.0
      %v291 = vmul.f32 %v279, 0.5
      %v292 = vmul.f32 %v280, 0.5
      %v293 = vmul.f32 %v281, 0.5
      %v294 = vmul.f32 %v282, 0.5
      %v295 = vmul.f32 %v291, %v279
      %v296 = vmul.f32 %v292, %v280
      %v297 = vmul.f32 %v293, %v281
      %v298 = vmul.f32 %v294, %v282
      %v299 = vsub.f32 %v283, 0.5
      %v300 = vsub.f32 %v284, 0.5
      %v301 = vsub.f32 %v285, 0.5
      %v302 = vsub.f32 %v286, 0.5
      %v303 = vsel %vm287, %v295, %v299
      %v304 = vsel %vm288, %v296, %v300
      %v305 = vsel %vm289, %v297, %v301
      %v306 = vsel %vm290, %v298, %v302
      %s307 = sld [smem:[#allocation3]]
      %v308 = vmul.f32 %v303, %v270
      %v309 = vmul.f32 %v304, %v270
      %v310 = vmul.f32 %v305, %v270
      %v311 = vmul.f32 %v306, %v270
      %v312 = vadd.f32 %v308, %v309
      %v313 = vadd.f32 %v312, %v310
      %v314 = vadd.f32 %v313, %v311
      %315 = vadd.xlane.f32.xlu0 %v314
      %v316 = vpop.xlane.xlu0 %315
      %v317 = vrot.slane %v316, 4
      %v318 = vadd.f32 %v316, %v317
      %v319 = vrot.slane %v318, 2
      %v320 = vadd.f32 %v318, %v319
      %v321 = vrot.slane %v320, 1
      %v322 = vadd.f32 %v320, %v321
      %s323 = vtos %v322
      %s324 = sadd.f32 %s307, %s323
      %s325 = scalar_lea.smem [#allocation3], 0
      %326 = sst [smem:[%s325]] %s324
      %v327 = vmax.f32 %v259, %v263
      %v328 = vmax.f32 %v260, %v264
      %v329 = vmax.f32 %v261, %v265
      %v330 = vmax.f32 %v262, %v266
      %v331 = vmax.f32 %v327, %v328
      %v332 = vmax.f32 %v329, %v330
      %v333 = vmax.f32 %v331, %v332
      %v334 = vsub.f32 %v259, %v333
      %v335 = vsub.f32 %v260, %v333
      %v336 = vsub.f32 %v261, %v333
      %v337 = vsub.f32 %v262, %v333
      %v338 = vsub.f32 %v263, %v333
      %v339 = vsub.f32 %v264, %v333
      %v340 = vsub.f32 %v265, %v333
      %v341 = vsub.f32 %v266, %v333
      %v342 = vmul.f32 %v334, 1.442695
      %v343 = vpow.pop %v342
      %v344 = vmul.f32 %v335, 1.442695
      %v345 = vpow.pop %v344
      %v346 = vmul.f32 %v336, 1.442695
      %v347 = vpow.pop %v346
      %v348 = vmul.f32 %v337, 1.442695
      %v349 = vpow.pop %v348
      %v350 = vmul.f32 %v338, 1.442695
      %v351 = vpow.pop %v350
      %v352 = vmul.f32 %v339, 1.442695
      %v353 = vpow.pop %v352
      %v354 = vmul.f32 %v340, 1.442695
      %v355 = vpow.pop %v354
      %v356 = vmul.f32 %v341, 1.442695
      %v357 = vpow.pop %v356
      %v358 = vadd.f32 %v343, %v345
      %v359 = vadd.f32 %v358, %v347
      %v360 = vadd.f32 %v359, %v349
      %v361 = vadd.f32 %v360, %v351
      %v362 = vadd.f32 %v361, %v353
      %v363 = vadd.f32 %v362, %v355
      %v364 = vadd.f32 %v363, %v357
      %v365 = vlog2.pop %v364
      %v366 = vmul.f32 %v365, 0.6931472
      %v367 = vadd.f32 %v333, %v366
      %vm368 = vcmp.eq.s32.totalorder %v267, 0
      %v369 = vsel %vm368, %v259, 0.0
      %v370 = vadd.f32 %v369, 0.0
      %vm371 = vcmp.eq.s32.totalorder %v267, 1
      %v372 = vsel %vm371, %v260, 0.0
      %v373 = vadd.f32 %v370, %v372
      %vm374 = vcmp.eq.s32.totalorder %v267, 2
      %v375 = vsel %vm374, %v261, 0.0
      %v376 = vadd.f32 %v373, %v375
      %vm377 = vcmp.eq.s32.totalorder %v267, 3
      %v378 = vsel %vm377, %v262, 0.0
      %v379 = vadd.f32 %v376, %v378
      %vm380 = vcmp.eq.s32.totalorder %v267, 4
      %v381 = vsel %vm380, %v263, 0.0
      %v382 = vadd.f32 %v379, %v381
      %vm383 = vcmp.eq.s32.totalorder %v267, 5
      %v384 = vsel %vm383, %v264, 0.0
      %v385 = vadd.f32 %v382, %v384
      %vm386 = vcmp.eq.s32.totalorder %v267, 6
      %v387 = vsel %vm386, %v265, 0.0
      %v388 = vadd.f32 %v385, %v387
      %vm389 = vcmp.eq.s32.totalorder %v267, 7
      %v390 = vsel %vm389, %v266, 0.0
      %v391 = vadd.f32 %v388, %v390
      %v392 = vsub.f32 %v367, %v391
      %s393 = sld [smem:[#allocation3 + $0x1]]
      %v394 = vmul.f32 %v392, %v270
      %395 = vadd.xlane.f32.xlu0 %v394
      %v396 = vpop.xlane.xlu0 %395
      %v397 = vrot.slane %v396, 4
      %v398 = vadd.f32 %v396, %v397
      %v399 = vrot.slane %v398, 2
      %v400 = vadd.f32 %v398, %v399
      %v401 = vrot.slane %v400, 1
      %v402 = vadd.f32 %v400, %v401
      %s403 = vtos %v402
      %s404 = sadd.f32 %s393, %s403
      %s405 = scalar_lea.smem [#allocation3], 1
      %406 = sst [smem:[%s405]] %s404
      %s407 = sld [smem:[#allocation3 + $0x2]]
      %408 = vadd.xlane.f32.xlu0 %v270
      %v409 = vpop.xlane.xlu0 %408
      %v410 = vrot.slane %v409, 4
      %v411 = vadd.f32 %v409, %v410
      %v412 = vrot.slane %v411, 2
      %v413 = vadd.f32 %v411, %v412
      %v414 = vrot.slane %v413, 1
      %v415 = vadd.f32 %v413, %v414
      %s416 = vtos %v415
      %s417 = sadd.f32 %s407, %s416
      %s418 = scalar_lea.smem [#allocation3], 2
      %419 = sst [smem:[%s418]] %s417
      %v420 = vlaneseq
      %v421 = vshrl.u32 %v420, 7
      %v422 = vlaneseq
      %v423 = vand.u32 %v422, 127
      %s424 = smul.u32 %s19, 128
      %v425 = vstv %s424
      %v426 = vadd.s32 %v423, %v425
      %v427 = vmul.u32 %v421, 128
      %v428 = vadd.s32 %v427, %v426
      %vm429 = vcmp.lt.s32.totalorder %v428, 128
      %vm430 = vmxor %vm268, 1
      %vm431 = vmand %vm429, %vm430
      %v432 = vsel %vm431, %v392, 0.0
      %s433 = sshra.s32 %s424, 7
      %s434 = sand.u32 %s424, 127
      %s435 = scalar_lea.vmem [#allocation2], %s433
      %436 = vst [vmem:[%s435] sm:$0xff] %v432
      // Predicated region
      $region37: #{multibox_loss_forward.1} parent=31 // pred_check
        %p437 = pneg %p249
      $region38: #{multibox_loss_forward.1} parent=31 // pred_check_branch
        %439 = sbr.rel (%p437) target = $region40
      $region39: #{multibox_loss_forward.1} parent=31 // pred_region
        %v440 = vld [vmem:[#allocation2] sm:$0xff]
        %s441 = sld [smem:[#allocation3 + $0x2]]
        %s442 = smul.f32 %s441, 3.0
        %s443 = smin.f32 %s442, 128.0
        %444 = vmax.xlane.f32.xlu0 %v440
        %v445 = vpop.xlane.xlu0 %444
        %v446 = vrot.slane %v445, 4
        %v447 = vmax.f32 %v445, %v446
        %v448 = vrot.slane %v447, 2
        %v449 = vmax.f32 %v447, %v448
        %v450 = vrot.slane %v449, 1
        %v451 = vmax.f32 %v449, %v450
        %v452 = vadd.f32 %v451, 1e-06
        %v453 = vadd.f32 %v452, -1e-06
        %v454 = vmul.f32 %v453, 0.5
        %vm455 = vcmp.gt.f32.partialorder %v440, %v454
        %v456 = vsel %vm455, 1, 0
        %v457 = vcvt.s32.f32 %v456
        %458 = vadd.xlane.f32.xlu0 %v457
        %v459 = vpop.xlane.xlu0 %458
        %v460 = vrot.slane %v459, 4
        %v461 = vadd.f32 %v459, %v460
        %v462 = vrot.slane %v461, 2
        %v463 = vadd.f32 %v461, %v462
        %v464 = vrot.slane %v463, 1
        %v465 = vadd.f32 %v463, %v464
        %v466 = vstv %s443
        %vm467 = vcmp.ge.f32.partialorder %v465, %v466
        %v468 = vsel %vm467, %v454, -1e-06
        %v469 = vsel %vm467, %v452, %v454
        %v470 = vadd.f32 %v468, %v469
        %v471 = vmul.f32 %v470, 0.5
        %vm472 = vcmp.gt.f32.partialorder %v440, %v471
        %v473 = vsel %vm472, 1, 0
        %v474 = vcvt.s32.f32 %v473
        %475 = vadd.xlane.f32.xlu0 %v474
        %v476 = vpop.xlane.xlu0 %475
        %v477 = vrot.slane %v476, 4
        %v478 = vadd.f32 %v476, %v477
        %v479 = vrot.slane %v478, 2
        %v480 = vadd.f32 %v478, %v479
        %v481 = vrot.slane %v480, 1
        %v482 = vadd.f32 %v480, %v481
        %vm483 = vcmp.ge.f32.partialorder %v482, %v466
        %v484 = vsel %vm483, %v471, %v468
        %v485 = vsel %vm483, %v469, %v471
        %v486 = vadd.f32 %v484, %v485
        %v487 = vmul.f32 %v486, 0.5
        %vm488 = vcmp.gt.f32.partialorder %v440, %v487
        %v489 = vsel %vm488, 1, 0
        %v490 = vcvt.s32.f32 %v489
        %491 = vadd.xlane.f32.xlu0 %v490
        %v492 = vpop.xlane.xlu0 %491
        %v493 = vrot.slane %v492, 4
        %v494 = vadd.f32 %v492, %v493
        %v495 = vrot.slane %v494, 2
        %v496 = vadd.f32 %v494, %v495
        %v497 = vrot.slane %v496, 1
        %v498 = vadd.f32 %v496, %v497
        %vm499 = vcmp.ge.f32.partialorder %v498, %v466
        %v500 = vsel %vm499, %v487, %v484
        %v501 = vsel %vm499, %v485, %v487
        %v502 = vadd.f32 %v500, %v501
        %v503 = vmul.f32 %v502, 0.5
        %vm504 = vcmp.gt.f32.partialorder %v440, %v503
        %v505 = vsel %vm504, 1, 0
        %v506 = vcvt.s32.f32 %v505
        %507 = vadd.xlane.f32.xlu0 %v506
        %v508 = vpop.xlane.xlu0 %507
        %v509 = vrot.slane %v508, 4
        %v510 = vadd.f32 %v508, %v509
        %v511 = vrot.slane %v510, 2
        %v512 = vadd.f32 %v510, %v511
        %v513 = vrot.slane %v512, 1
        %v514 = vadd.f32 %v512, %v513
        %vm515 = vcmp.ge.f32.partialorder %v514, %v466
        %v516 = vsel %vm515, %v503, %v500
        %v517 = vsel %vm515, %v501, %v503
        %v518 = vadd.f32 %v516, %v517
        %v519 = vmul.f32 %v518, 0.5
        %vm520 = vcmp.gt.f32.partialorder %v440, %v519
        %v521 = vsel %vm520, 1, 0
        %v522 = vcvt.s32.f32 %v521
        %523 = vadd.xlane.f32.xlu0 %v522
        %v524 = vpop.xlane.xlu0 %523
        %v525 = vrot.slane %v524, 4
        %v526 = vadd.f32 %v524, %v525
        %v527 = vrot.slane %v526, 2
        %v528 = vadd.f32 %v526, %v527
        %v529 = vrot.slane %v528, 1
        %v530 = vadd.f32 %v528, %v529
        %vm531 = vcmp.ge.f32.partialorder %v530, %v466
        %v532 = vsel %vm531, %v519, %v516
        %v533 = vsel %vm531, %v517, %v519
        %v534 = vadd.f32 %v532, %v533
        %v535 = vmul.f32 %v534, 0.5
        %vm536 = vcmp.gt.f32.partialorder %v440, %v535
        %v537 = vsel %vm536, 1, 0
        %v538 = vcvt.s32.f32 %v537
        %539 = vadd.xlane.f32.xlu0 %v538
        %v540 = vpop.xlane.xlu0 %539
        %v541 = vrot.slane %v540, 4
        %v542 = vadd.f32 %v540, %v541
        %v543 = vrot.slane %v542, 2
        %v544 = vadd.f32 %v542, %v543
        %v545 = vrot.slane %v544, 1
        %v546 = vadd.f32 %v544, %v545
        %vm547 = vcmp.ge.f32.partialorder %v546, %v466
        %v548 = vsel %vm547, %v535, %v532
        %v549 = vsel %vm547, %v533, %v535
        %v550 = vadd.f32 %v548, %v549
        %v551 = vmul.f32 %v550, 0.5
        %vm552 = vcmp.gt.f32.partialorder %v440, %v551
        %v553 = vsel %vm552, 1, 0
        %v554 = vcvt.s32.f32 %v553
        %555 = vadd.xlane.f32.xlu0 %v554
        %v556 = vpop.xlane.xlu0 %555
        %v557 = vrot.slane %v556, 4
        %v558 = vadd.f32 %v556, %v557
        %v559 = vrot.slane %v558, 2
        %v560 = vadd.f32 %v558, %v559
        %v561 = vrot.slane %v560, 1
        %v562 = vadd.f32 %v560, %v561
        %vm563 = vcmp.ge.f32.partialorder %v562, %v466
        %v564 = vsel %vm563, %v551, %v548
        %v565 = vsel %vm563, %v549, %v551
        %v566 = vadd.f32 %v564, %v565
        %v567 = vmul.f32 %v566, 0.5
        %vm568 = vcmp.gt.f32.partialorder %v440, %v567
        %v569 = vsel %vm568, 1, 0
        %v570 = vcvt.s32.f32 %v569
        %571 = vadd.xlane.f32.xlu0 %v570
        %v572 = vpop.xlane.xlu0 %571
        %v573 = vrot.slane %v572, 4
        %v574 = vadd.f32 %v572, %v573
        %v575 = vrot.slane %v574, 2
        %v576 = vadd.f32 %v574, %v575
        %v577 = vrot.slane %v576, 1
        %v578 = vadd.f32 %v576, %v577
        %vm579 = vcmp.ge.f32.partialorder %v578, %v466
        %v580 = vsel %vm579, %v567, %v564
        %v581 = vsel %vm579, %v565, %v567
        %v582 = vadd.f32 %v580, %v581
        %v583 = vmul.f32 %v582, 0.5
        %vm584 = vcmp.gt.f32.partialorder %v440, %v583
        %v585 = vsel %vm584, 1, 0
        %v586 = vcvt.s32.f32 %v585
        %587 = vadd.xlane.f32.xlu0 %v586
        %v588 = vpop.xlane.xlu0 %587
        %v589 = vrot.slane %v588, 4
        %v590 = vadd.f32 %v588, %v589
        %v591 = vrot.slane %v590, 2
        %v592 = vadd.f32 %v590, %v591
        %v593 = vrot.slane %v592, 1
        %v594 = vadd.f32 %v592, %v593
        %vm595 = vcmp.ge.f32.partialorder %v594, %v466
        %v596 = vsel %vm595, %v583, %v580
        %v597 = vsel %vm595, %v581, %v583
        %v598 = vadd.f32 %v596, %v597
        %v599 = vmul.f32 %v598, 0.5
        %vm600 = vcmp.gt.f32.partialorder %v440, %v599
        %v601 = vsel %vm600, 1, 0
        %v602 = vcvt.s32.f32 %v601
        %603 = vadd.xlane.f32.xlu0 %v602
        %v604 = vpop.xlane.xlu0 %603
        %v605 = vrot.slane %v604, 4
        %v606 = vadd.f32 %v604, %v605
        %v607 = vrot.slane %v606, 2
        %v608 = vadd.f32 %v606, %v607
        %v609 = vrot.slane %v608, 1
        %v610 = vadd.f32 %v608, %v609
        %vm611 = vcmp.ge.f32.partialorder %v610, %v466
        %v612 = vsel %vm611, %v599, %v596
        %v613 = vsel %vm611, %v597, %v599
        %v614 = vadd.f32 %v612, %v613
        %v615 = vmul.f32 %v614, 0.5
        %vm616 = vcmp.gt.f32.partialorder %v440, %v615
        %v617 = vsel %vm616, 1, 0
        %v618 = vcvt.s32.f32 %v617
        %619 = vadd.xlane.f32.xlu0 %v618
        %v620 = vpop.xlane.xlu0 %619
        %v621 = vrot.slane %v620, 4
        %v622 = vadd.f32 %v620, %v621
        %v623 = vrot.slane %v622, 2
        %v624 = vadd.f32 %v622, %v623
        %v625 = vrot.slane %v624, 1
        %v626 = vadd.f32 %v624, %v625
        %vm627 = vcmp.ge.f32.partialorder %v626, %v466
        %v628 = vsel %vm627, %v615, %v612
        %v629 = vsel %vm627, %v613, %v615
        %v630 = vadd.f32 %v628, %v629
        %v631 = vmul.f32 %v630, 0.5
        %vm632 = vcmp.gt.f32.partialorder %v440, %v631
        %v633 = vsel %vm632, 1, 0
        %v634 = vcvt.s32.f32 %v633
        %635 = vadd.xlane.f32.xlu0 %v634
        %v636 = vpop.xlane.xlu0 %635
        %v637 = vrot.slane %v636, 4
        %v638 = vadd.f32 %v636, %v637
        %v639 = vrot.slane %v638, 2
        %v640 = vadd.f32 %v638, %v639
        %v641 = vrot.slane %v640, 1
        %v642 = vadd.f32 %v640, %v641
        %vm643 = vcmp.ge.f32.partialorder %v642, %v466
        %v644 = vsel %vm643, %v631, %v628
        %v645 = vsel %vm643, %v629, %v631
        %v646 = vadd.f32 %v644, %v645
        %v647 = vmul.f32 %v646, 0.5
        %vm648 = vcmp.gt.f32.partialorder %v440, %v647
        %v649 = vsel %vm648, 1, 0
        %v650 = vcvt.s32.f32 %v649
        %651 = vadd.xlane.f32.xlu0 %v650
        %v652 = vpop.xlane.xlu0 %651
        %v653 = vrot.slane %v652, 4
        %v654 = vadd.f32 %v652, %v653
        %v655 = vrot.slane %v654, 2
        %v656 = vadd.f32 %v654, %v655
        %v657 = vrot.slane %v656, 1
        %v658 = vadd.f32 %v656, %v657
        %vm659 = vcmp.ge.f32.partialorder %v658, %v466
        %v660 = vsel %vm659, %v647, %v644
        %v661 = vsel %vm659, %v645, %v647
        %v662 = vadd.f32 %v660, %v661
        %v663 = vmul.f32 %v662, 0.5
        %vm664 = vcmp.gt.f32.partialorder %v440, %v663
        %v665 = vsel %vm664, 1, 0
        %v666 = vcvt.s32.f32 %v665
        %667 = vadd.xlane.f32.xlu0 %v666
        %v668 = vpop.xlane.xlu0 %667
        %v669 = vrot.slane %v668, 4
        %v670 = vadd.f32 %v668, %v669
        %v671 = vrot.slane %v670, 2
        %v672 = vadd.f32 %v670, %v671
        %v673 = vrot.slane %v672, 1
        %v674 = vadd.f32 %v672, %v673
        %vm675 = vcmp.ge.f32.partialorder %v674, %v466
        %v676 = vsel %vm675, %v663, %v660
        %v677 = vsel %vm675, %v661, %v663
        %v678 = vadd.f32 %v676, %v677
        %v679 = vmul.f32 %v678, 0.5
        %vm680 = vcmp.gt.f32.partialorder %v440, %v679
        %v681 = vsel %vm680, 1, 0
        %v682 = vcvt.s32.f32 %v681
        %683 = vadd.xlane.f32.xlu0 %v682
        %v684 = vpop.xlane.xlu0 %683
        %v685 = vrot.slane %v684, 4
        %v686 = vadd.f32 %v684, %v685
        %v687 = vrot.slane %v686, 2
        %v688 = vadd.f32 %v686, %v687
        %v689 = vrot.slane %v688, 1
        %v690 = vadd.f32 %v688, %v689
        %vm691 = vcmp.ge.f32.partialorder %v690, %v466
        %v692 = vsel %vm691, %v679, %v676
        %v693 = vsel %vm691, %v677, %v679
        %v694 = vadd.f32 %v692, %v693
        %v695 = vmul.f32 %v694, 0.5
        %vm696 = vcmp.gt.f32.partialorder %v440, %v695
        %v697 = vsel %vm696, 1, 0
        %v698 = vcvt.s32.f32 %v697
        %699 = vadd.xlane.f32.xlu0 %v698
        %v700 = vpop.xlane.xlu0 %699
        %v701 = vrot.slane %v700, 4
        %v702 = vadd.f32 %v700, %v701
        %v703 = vrot.slane %v702, 2
        %v704 = vadd.f32 %v702, %v703
        %v705 = vrot.slane %v704, 1
        %v706 = vadd.f32 %v704, %v705
        %vm707 = vcmp.ge.f32.partialorder %v706, %v466
        %v708 = vsel %vm707, %v695, %v692
        %v709 = vsel %vm707, %v693, %v695
        %v710 = vadd.f32 %v708, %v709
        %v711 = vmul.f32 %v710, 0.5
        %vm712 = vcmp.gt.f32.partialorder %v440, %v711
        %v713 = vsel %vm712, 1, 0
        %v714 = vcvt.s32.f32 %v713
        %715 = vadd.xlane.f32.xlu0 %v714
        %v716 = vpop.xlane.xlu0 %715
        %v717 = vrot.slane %v716, 4
        %v718 = vadd.f32 %v716, %v717
        %v719 = vrot.slane %v718, 2
        %v720 = vadd.f32 %v718, %v719
        %v721 = vrot.slane %v720, 1
        %v722 = vadd.f32 %v720, %v721
        %vm723 = vcmp.ge.f32.partialorder %v722, %v466
        %v724 = vsel %vm723, %v711, %v708
        %v725 = vsel %vm723, %v709, %v711
        %v726 = vadd.f32 %v724, %v725
        %v727 = vmul.f32 %v726, 0.5
        %vm728 = vcmp.gt.f32.partialorder %v440, %v727
        %v729 = vsel %vm728, 1, 0
        %v730 = vcvt.s32.f32 %v729
        %731 = vadd.xlane.f32.xlu0 %v730
        %v732 = vpop.xlane.xlu0 %731
        %v733 = vrot.slane %v732, 4
        %v734 = vadd.f32 %v732, %v733
        %v735 = vrot.slane %v734, 2
        %v736 = vadd.f32 %v734, %v735
        %v737 = vrot.slane %v736, 1
        %v738 = vadd.f32 %v736, %v737
        %vm739 = vcmp.ge.f32.partialorder %v738, %v466
        %v740 = vsel %vm739, %v727, %v724
        %v741 = vsel %vm739, %v725, %v727
        %v742 = vadd.f32 %v740, %v741
        %v743 = vmul.f32 %v742, 0.5
        %vm744 = vcmp.gt.f32.partialorder %v440, %v743
        %v745 = vsel %vm744, 1, 0
        %v746 = vcvt.s32.f32 %v745
        %747 = vadd.xlane.f32.xlu0 %v746
        %v748 = vpop.xlane.xlu0 %747
        %v749 = vrot.slane %v748, 4
        %v750 = vadd.f32 %v748, %v749
        %v751 = vrot.slane %v750, 2
        %v752 = vadd.f32 %v750, %v751
        %v753 = vrot.slane %v752, 1
        %v754 = vadd.f32 %v752, %v753
        %vm755 = vcmp.ge.f32.partialorder %v754, %v466
        %v756 = vsel %vm755, %v743, %v740
        %v757 = vsel %vm755, %v741, %v743
        %v758 = vadd.f32 %v756, %v757
        %v759 = vmul.f32 %v758, 0.5
        %vm760 = vcmp.gt.f32.partialorder %v440, %v759
        %v761 = vsel %vm760, 1, 0
        %v762 = vcvt.s32.f32 %v761
        %763 = vadd.xlane.f32.xlu0 %v762
        %v764 = vpop.xlane.xlu0 %763
        %v765 = vrot.slane %v764, 4
        %v766 = vadd.f32 %v764, %v765
        %v767 = vrot.slane %v766, 2
        %v768 = vadd.f32 %v766, %v767
        %v769 = vrot.slane %v768, 1
        %v770 = vadd.f32 %v768, %v769
        %vm771 = vcmp.ge.f32.partialorder %v770, %v466
        %v772 = vsel %vm771, %v759, %v756
        %v773 = vsel %vm771, %v757, %v759
        %v774 = vadd.f32 %v772, %v773
        %v775 = vmul.f32 %v774, 0.5
        %vm776 = vcmp.gt.f32.partialorder %v440, %v775
        %v777 = vsel %vm776, 1, 0
        %v778 = vcvt.s32.f32 %v777
        %779 = vadd.xlane.f32.xlu0 %v778
        %v780 = vpop.xlane.xlu0 %779
        %v781 = vrot.slane %v780, 4
        %v782 = vadd.f32 %v780, %v781
        %v783 = vrot.slane %v782, 2
        %v784 = vadd.f32 %v782, %v783
        %v785 = vrot.slane %v784, 1
        %v786 = vadd.f32 %v784, %v785
        %vm787 = vcmp.ge.f32.partialorder %v786, %v466
        %v788 = vsel %vm787, %v775, %v772
        %v789 = vsel %vm787, %v773, %v775
        %v790 = vadd.f32 %v788, %v789
        %v791 = vmul.f32 %v790, 0.5
        %vm792 = vcmp.gt.f32.partialorder %v440, %v791
        %v793 = vsel %vm792, 1, 0
        %v794 = vcvt.s32.f32 %v793
        %795 = vadd.xlane.f32.xlu0 %v794
        %v796 = vpop.xlane.xlu0 %795
        %v797 = vrot.slane %v796, 4
        %v798 = vadd.f32 %v796, %v797
        %v799 = vrot.slane %v798, 2
        %v800 = vadd.f32 %v798, %v799
        %v801 = vrot.slane %v800, 1
        %v802 = vadd.f32 %v800, %v801
        %vm803 = vcmp.ge.f32.partialorder %v802, %v466
        %v804 = vsel %vm803, %v791, %v788
        %v805 = vsel %vm803, %v789, %v791
        %v806 = vadd.f32 %v804, %v805
        %v807 = vmul.f32 %v806, 0.5
        %vm808 = vcmp.gt.f32.partialorder %v440, %v807
        %v809 = vsel %vm808, 1, 0
        %v810 = vcvt.s32.f32 %v809
        %811 = vadd.xlane.f32.xlu0 %v810
        %v812 = vpop.xlane.xlu0 %811
        %v813 = vrot.slane %v812, 4
        %v814 = vadd.f32 %v812, %v813
        %v815 = vrot.slane %v814, 2
        %v816 = vadd.f32 %v814, %v815
        %v817 = vrot.slane %v816, 1
        %v818 = vadd.f32 %v816, %v817
        %vm819 = vcmp.ge.f32.partialorder %v818, %v466
        %v820 = vsel %vm819, %v807, %v804
        %v821 = vsel %vm819, %v805, %v807
        %v822 = vadd.f32 %v820, %v821
        %v823 = vmul.f32 %v822, 0.5
        %vm824 = vcmp.gt.f32.partialorder %v440, %v823
        %v825 = vsel %vm824, 1, 0
        %v826 = vcvt.s32.f32 %v825
        %827 = vadd.xlane.f32.xlu0 %v826
        %v828 = vpop.xlane.xlu0 %827
        %v829 = vrot.slane %v828, 4
        %v830 = vadd.f32 %v828, %v829
        %v831 = vrot.slane %v830, 2
        %v832 = vadd.f32 %v830, %v831
        %v833 = vrot.slane %v832, 1
        %v834 = vadd.f32 %v832, %v833
        %vm835 = vcmp.ge.f32.partialorder %v834, %v466
        %v836 = vsel %vm835, %v823, %v820
        %v837 = vsel %vm835, %v821, %v823
        %v838 = vadd.f32 %v836, %v837
        %v839 = vmul.f32 %v838, 0.5
        %vm840 = vcmp.gt.f32.partialorder %v440, %v839
        %v841 = vsel %vm840, 1, 0
        %v842 = vcvt.s32.f32 %v841
        %843 = vadd.xlane.f32.xlu0 %v842
        %v844 = vpop.xlane.xlu0 %843
        %v845 = vrot.slane %v844, 4
        %v846 = vadd.f32 %v844, %v845
        %v847 = vrot.slane %v846, 2
        %v848 = vadd.f32 %v846, %v847
        %v849 = vrot.slane %v848, 1
        %v850 = vadd.f32 %v848, %v849
        %vm851 = vcmp.ge.f32.partialorder %v850, %v466
        %v852 = vsel %vm851, %v839, %v836
        %v853 = vsel %vm851, %v837, %v839
        %v854 = vadd.f32 %v852, %v853
        %v855 = vmul.f32 %v854, 0.5
        %vm856 = vcmp.gt.f32.partialorder %v440, %v855
        %v857 = vsel %vm856, 1, 0
        %v858 = vcvt.s32.f32 %v857
        %859 = vadd.xlane.f32.xlu0 %v858
        %v860 = vpop.xlane.xlu0 %859
        %v861 = vrot.slane %v860, 4
        %v862 = vadd.f32 %v860, %v861
        %v863 = vrot.slane %v862, 2
        %v864 = vadd.f32 %v862, %v863
        %v865 = vrot.slane %v864, 1
        %v866 = vadd.f32 %v864, %v865
        %vm867 = vcmp.ge.f32.partialorder %v866, %v466
        %v868 = vsel %vm867, %v855, %v852
        %v869 = vsel %vm867, %v853, %v855
        %v870 = vadd.f32 %v868, %v869
        %v871 = vmul.f32 %v870, 0.5
        %vm872 = vcmp.gt.f32.partialorder %v440, %v871
        %v873 = vsel %vm872, 1, 0
        %v874 = vcvt.s32.f32 %v873
        %875 = vadd.xlane.f32.xlu0 %v874
        %v876 = vpop.xlane.xlu0 %875
        %v877 = vrot.slane %v876, 4
        %v878 = vadd.f32 %v876, %v877
        %v879 = vrot.slane %v878, 2
        %v880 = vadd.f32 %v878, %v879
        %v881 = vrot.slane %v880, 1
        %v882 = vadd.f32 %v880, %v881
        %vm883 = vcmp.ge.f32.partialorder %v882, %v466
        %v884 = vsel %vm883, %v871, %v868
        %v885 = vsel %vm883, %v869, %v871
        %v886 = vadd.f32 %v884, %v885
        %v887 = vmul.f32 %v886, 0.5
        %vm888 = vcmp.gt.f32.partialorder %v440, %v887
        %v889 = vsel %vm888, 1, 0
        %v890 = vcvt.s32.f32 %v889
        %891 = vadd.xlane.f32.xlu0 %v890
        %v892 = vpop.xlane.xlu0 %891
        %v893 = vrot.slane %v892, 4
        %v894 = vadd.f32 %v892, %v893
        %v895 = vrot.slane %v894, 2
        %v896 = vadd.f32 %v894, %v895
        %v897 = vrot.slane %v896, 1
        %v898 = vadd.f32 %v896, %v897
        %vm899 = vcmp.ge.f32.partialorder %v898, %v466
        %v900 = vsel %vm899, %v887, %v884
        %v901 = vsel %vm899, %v885, %v887
        %v902 = vadd.f32 %v900, %v901
        %v903 = vmul.f32 %v902, 0.5
        %vm904 = vcmp.gt.f32.partialorder %v440, %v903
        %v905 = vsel %vm904, 1, 0
        %v906 = vcvt.s32.f32 %v905
        %907 = vadd.xlane.f32.xlu0 %v906
        %v908 = vpop.xlane.xlu0 %907
        %v909 = vrot.slane %v908, 4
        %v910 = vadd.f32 %v908, %v909
        %v911 = vrot.slane %v910, 2
        %v912 = vadd.f32 %v910, %v911
        %v913 = vrot.slane %v912, 1
        %v914 = vadd.f32 %v912, %v913
        %vm915 = vcmp.ge.f32.partialorder %v914, %v466
        %v916 = vsel %vm915, %v903, %v900
        %v917 = vsel %vm915, %v901, %v903
        %v918 = vadd.f32 %v916, %v917
        %v919 = vmul.f32 %v918, 0.5
        %vm920 = vcmp.gt.f32.partialorder %v440, %v919
        %v921 = vsel %vm920, 1, 0
        %v922 = vcvt.s32.f32 %v921
        %923 = vadd.xlane.f32.xlu0 %v922
        %v924 = vpop.xlane.xlu0 %923
        %v925 = vrot.slane %v924, 4
        %v926 = vadd.f32 %v924, %v925
        %v927 = vrot.slane %v926, 2
        %v928 = vadd.f32 %v926, %v927
        %v929 = vrot.slane %v928, 1
        %v930 = vadd.f32 %v928, %v929
        %vm931 = vcmp.ge.f32.partialorder %v930, %v466
        %v932 = vsel %vm931, %v917, %v919
        %vm933 = vcmp.gt.f32.partialorder %v440, %v932
        %v934 = vsel %vm933, 1, 0
        %v935 = vcvt.s32.f32 %v934
        %936 = vadd.xlane.f32.xlu0 %v935
        %v937 = vpop.xlane.xlu0 %936
        %v938 = vrot.slane %v937, 4
        %v939 = vadd.f32 %v937, %v938
        %v940 = vrot.slane %v939, 2
        %v941 = vadd.f32 %v939, %v940
        %v942 = vrot.slane %v941, 1
        %v943 = vadd.f32 %v941, %v942
        %v944 = vsel %vm933, %v440, 0.0
        %945 = vadd.xlane.f32.xlu0 %v944
        %v946 = vpop.xlane.xlu0 %945
        %v947 = vrot.slane %v946, 4
        %v948 = vadd.f32 %v946, %v947
        %v949 = vrot.slane %v948, 2
        %v950 = vadd.f32 %v948, %v949
        %v951 = vrot.slane %v950, 1
        %v952 = vadd.f32 %v950, %v951
        %v953 = vsub.f32 %v466, %v943
        %v954 = vmax.f32 %v932, 0.0
        %v955 = vmul.f32 %v953, %v954
        %v956 = vadd.f32 %v952, %v955
        %vm957 = vcmp.eq.s32.totalorder %v423, 0
        %s958 = sld [smem:[#allocation3]]
        %v959 = vstv %s958
        %v960 = vsel %vm957, %v959, 0.0
        %vm961 = vcmp.eq.s32.totalorder %v423, 1
        %s962 = sld [smem:[#allocation3 + $0x1]]
        %v963 = vstv %s962
        %v964 = vadd.f32 %v963, %v956
        %v965 = vsel %vm961, %v964, 0.0
        %v966 = vadd.f32 %v960, %v965
        %vm967 = vcmp.eq.s32.totalorder %v423, 2
        %v968 = vstv %s441
        %v969 = vsel %vm967, %v968, 0.0
        %v970 = vadd.f32 %v966, %v969
        %971 = vst [vmem:[%s248] sm:$0x1] %v970
      $region40: #{multibox_loss_forward.1} parent=31 // pred_fallthru
        _
      %p972 = scmp.lt.s32.totalorder %s18, 1
      %s973 = scalar_select %p972, %s18, 1
      %s974 = scalar_lea.vmem %s3, %s973
      // Predicated region
      $region41: #{multibox_loss_forward.1} parent=31 // pred_check
        %p975 = pneg %p128
      $region42: #{multibox_loss_forward.1} parent=31 // pred_check_branch
        %977 = sbr.rel (%p975) target = $region44
      $region43: #{multibox_loss_forward.1} parent=31 // pred_region
        _
      $region44: #{multibox_loss_forward.1} parent=31 // pred_fallthru
        _
    $region32: #{multibox_loss_forward.1} parent=5 // pred_fallthru
      _
    %p978 = scmp.le.s32.totalorder 2, %s9
    // Predicated region
    $region45: #{multibox_loss_forward.1} parent=5 // pred_check
      %p979 = pneg %p978
    $region46: #{multibox_loss_forward.1} parent=5 // pred_check_branch
      %981 = sbr.rel (%p979) target = $region48
    $region47: #{multibox_loss_forward.1} parent=5 // pred_region
      %s982 = ssub.s32 %s9, 2
      // Predicated region
      $region49: #{multibox_loss_forward.1} parent=47 // pred_check
        %p983 = pneg %p134
      $region50: #{multibox_loss_forward.1} parent=47 // pred_check_branch
        %985 = sbr.rel (%p983) target = $region52
      $region51: #{multibox_loss_forward.1} parent=47 // pred_region
        %p986 = scmp.lt.s32.totalorder %s20, 1
        %s987 = scalar_select %p986, %s20, 1
        %s988 = scalar_lea.vmem %s3, %s987
      $region52: #{multibox_loss_forward.1} parent=47 // pred_fallthru
        _
    $region48: #{multibox_loss_forward.1} parent=5 // pred_fallthru
      _
  $region6: #{multibox_loss_forward.1} parent=0 // loop_footer
    %s13 = sadd.s32 1, %s9
  $region7: #{multibox_loss_forward.1} parent=0 // loop_footer_branch
    %8 = sbr.rel target = $region3
  $region8: #{multibox_loss_forward.1} parent=0 // loop_exit
    _

</llo_original>
